<compile_context>
chip_gen: v7x
topology: tpu7x:2x2x1
jax: 0.10.0
libtpu: 0.0.40
codegen_flags: <defaults>
</compile_context>

<pallas_src>
import functools

import jax
import jax.numpy as jnp
from jax.experimental import pallas as pl
from jax.experimental.pallas import tpu as pltpu


# Rows-per-tile for the M-tiled grid. Small K (<= ~600) means a 512-row bf16
# tile is ~0.6 MiB per buffer: comfortably inside the scoped-VMEM default on
# v5e/v6e (32 MiB of 128 MiB) and v7x (32 MiB of 64 MiB) with double-buffering.
TILE_M = 512


def _round_up(x, m):
    return (x + m - 1) // m * m


def _conv_out(s, k, stride):
    return (s - k) // stride + 1


# ----------------------------- Pallas kernel ------------------------------- #
def _chain_matmul_kernel(*refs, n_layers, relus):
    """refs = (x, w0, b0, w1, b1, ..., out).

    Computes h = x; for each layer: h = [relu](h @ w_i + b_i), chained in
    VMEM/vregs. Matmuls run bf16 x bf16 -> f32 accumulate on the MXU; the
    bias-add/ReLU epilogue stays in f32 (VPU), intermediates are re-cast to
    bf16 only to feed the next matmul.
    """
    x_ref = refs[0]
    o_ref = refs[-1]
    h = x_ref[...]
    for i in range(n_layers):
        w = refs[1 + 2 * i][...]
        b = refs[2 + 2 * i][...]                    # (1, N) f32, broadcasts
        acc = jnp.dot(h, w, preferred_element_type=jnp.float32)
        acc = acc + b
        if relus[i]:
            acc = jnp.maximum(acc, 0.0)
        h = acc.astype(jnp.bfloat16) if i + 1 < n_layers else acc
    o_ref[...] = h.astype(o_ref.dtype)


def chain_matmul_pallas(x, layers, *, out_dtype=jnp.bfloat16, tile_m=TILE_M):
    """x: (M, K). layers: list of (w (K_i, N_i) bf16, b (1, N_i) f32, relu).

    Returns (M, N_last) in out_dtype. Grid tiles M (marked "parallel");
    weights/biases are whole-array blocks that stay resident in VMEM across
    grid steps (block index never changes -> no re-DMA).
    """
    x = x.astype(jnp.bfloat16)
    M, K = x.shape
    n_layers = len(layers)
    n_out = layers[-1][0].shape[1]

    m_pad = _round_up(M, 8)
    if m_pad > tile_m:
        m_pad = _round_up(M, tile_m)
    else:
        tile_m = m_pad
    if m_pad != M:
        x = jnp.pad(x, ((0, m_pad - M), (0, 0)))

    grid = (m_pad // tile_m,)
    in_specs = [pl.BlockSpec((tile_m, K), lambda i: (i, 0))]
    operands = [x]
    for (w, b, _) in layers:
        kk, nn = w.shape
        in_specs.append(pl.BlockSpec((kk, nn), lambda i: (0, 0)))
        in_specs.append(pl.BlockSpec((1, nn), lambda i: (0, 0)))
        operands.extend([w, b])
    relus = tuple(bool(r) for (_, _, r) in layers)

    kern = functools.partial(_chain_matmul_kernel, n_layers=n_layers, relus=relus)
    out = pl.pallas_call(
        kern,
        out_shape=jax.ShapeDtypeStruct((m_pad, n_out), out_dtype),
        grid=grid,
        in_specs=in_specs,
        out_specs=pl.BlockSpec((tile_m, n_out), lambda i: (i, 0)),
        compiler_params=pltpu.CompilerParams(dimension_semantics=("parallel",)),
    )(*operands)
    return out[:M]


# ----------------------------- Conv via im2col ----------------------------- #
def _im2col_nhwc(x, kh, kw, stride):
    """x: (N, H, W, C) NHWC -> patches (N*OH*OW, KH*KW*C); feature order (kh, kw, c)."""
    n, h, w, c = x.shape
    oh = _conv_out(h, kh, stride)
    ow = _conv_out(w, kw, stride)
    cols = []
    for i in range(kh):
        for j in range(kw):
            cols.append(x[:, i:i + stride * oh:stride, j:j + stride * ow:stride, :])
    p = jnp.stack(cols, axis=3)                         # (N, OH, OW, KH*KW, C)
    return p.reshape(n * oh * ow, kh * kw * c), oh, ow


# ------------------------------- parameters -------------------------------- #
def init_dqn_params(key, in_channels, n_actions, conv_out_size):
    ks = jax.random.split(key, 10)

    def w_init(k, shape, fan_in):
        return (jax.random.normal(k, shape, jnp.float32) / jnp.sqrt(fan_in)).astype(jnp.float32)

    return {
        "conv1_w": w_init(ks[0], (32, in_channels, 8, 8), in_channels * 64),
        "conv1_b": w_init(ks[1], (32,), in_channels * 64),
        "conv2_w": w_init(ks[2], (64, 32, 4, 4), 32 * 16),
        "conv2_b": w_init(ks[3], (64,), 32 * 16),
        "conv3_w": w_init(ks[4], (64, 64, 3, 3), 64 * 9),
        "conv3_b": w_init(ks[5], (64,), 64 * 9),
        "fc1_w": w_init(ks[6], (conv_out_size, 512), conv_out_size),
        "fc1_b": w_init(ks[7], (512,), conv_out_size),
        "fc2_w": w_init(ks[8], (512, n_actions), 512),
        "fc2_b": w_init(ks[9], (512,), 512)[:n_actions] * 0 + w_init(ks[9], (n_actions,), 512),
    }


def prepare_params(params, in_hw):
    """One-time conversion of PyTorch-layout params to kernel-ready operands."""
    h, w = in_hw
    oh1, ow1 = _conv_out(h, 8, 4), _conv_out(w, 8, 4)
    oh2, ow2 = _conv_out(oh1, 4, 2), _conv_out(ow1, 4, 2)
    oh3, ow3 = _conv_out(oh2, 3, 1), _conv_out(ow2, 3, 1)
    fused_tail = (oh3 == 1 and ow3 == 1)

    def conv_w(wp):  # (Cout, Cin, KH, KW) -> (KH*KW*Cin, Cout) bf16, (kh,kw,c) rows
        cout, cin, kh, kw = wp.shape
        return jnp.transpose(wp, (2, 3, 1, 0)).reshape(kh * kw * cin, cout).astype(jnp.bfloat16)

    def bias(bv):
        return bv.reshape(1, -1).astype(jnp.float32)

    def pad_cols(w2, b, mult=128):  # zero-pad output columns -> lane-dense stores
        k, n = w2.shape
        n_pad = _round_up(n, mult)
        if n_pad != n:
            w2 = jnp.pad(w2, ((0, 0), (0, n_pad - n)))
            b = jnp.pad(b, ((0, 0), (0, n_pad - n)))
        return w2, b

    c1_w, c1_b = pad_cols(conv_w(params["conv1_w"]), bias(params["conv1_b"]))
    c2_w, c2_b = pad_cols(conv_w(params["conv2_w"]), bias(params["conv2_b"]))
    c3_w, c3_b = conv_w(params["conv3_w"]), bias(params["conv3_b"])
    if not fused_tail:
        c3_w, c3_b = pad_cols(c3_w, c3_b)   # conv3 output is stored -> lane-dense

    c3_out = params["conv3_w"].shape[0]
    # Permute fc1 rows once so a NHWC (h, w, c) flatten matches PyTorch's
    # NCHW .view(N, -1) flatten order (identity when conv3 output is 1x1).
    fc1_w = params["fc1_w"].reshape(c3_out, oh3, ow3, -1)
    fc1_w = fc1_w.transpose(1, 2, 0, 3).reshape(oh3 * ow3 * c3_out, -1).astype(jnp.bfloat16)
    fc1_b = bias(params["fc1_b"])
    fc2_w, fc2_b = pad_cols(params["fc2_w"].astype(jnp.bfloat16), bias(params["fc2_b"]))

    return {
        "fused_tail": fused_tail,
        "n_actions": params["fc2_w"].shape[1],
        "cout": (params["conv1_w"].shape[0], params["conv2_w"].shape[0], c3_out),
        "c1": (c1_w, c1_b), "c2": (c2_w, c2_b), "c3": (c3_w, c3_b),
        "fc1": (fc1_w, fc1_b), "fc2": (fc2_w, fc2_b),
    }


# ------------------------------- DQN forward -------------------------------- #
def dqn_forward(prep, x):
    """x: (N, C, H, W) float32 -> Q-values (N, n_actions) float32."""
    n = x.shape[0]
    c1_out, c2_out, c3_out = prep["cout"]
    # Single layout change: NCHW -> NHWC, bf16 for the MXU.
    x = jnp.transpose(x, (0, 2, 3, 1)).astype(jnp.bfloat16)

    # conv1 + ReLU
    p1, oh1, ow1 = _im2col_nhwc(x, 8, 8, 4)
    h1 = chain_matmul_pallas(p1, [(*prep["c1"], True)])[:, :c1_out]
    h1 = h1.reshape(n, oh1, ow1, c1_out)

    # conv2 + ReLU
    p2, oh2, ow2 = _im2col_nhwc(h1, 4, 4, 2)
    h2 = chain_matmul_pallas(p2, [(*prep["c2"], True)])[:, :c2_out]
    h2 = h2.reshape(n, oh2, ow2, c2_out)

    # conv3 + ReLU + fc1 + ReLU + fc2
    p3, oh3, ow3 = _im2col_nhwc(h2, 3, 3, 1)
    if prep["fused_tail"]:
        # conv3 output spatial is 1x1 -> conv3 is a pure matmul; fuse the whole
        # tail (3 matmuls) into one pallas_call; intermediates never hit HBM.
        layers = [(*prep["c3"], True), (*prep["fc1"], True), (*prep["fc2"], False)]
        q = chain_matmul_pallas(p3, layers, out_dtype=jnp.float32)
    else:
        h3 = chain_matmul_pallas(p3, [(*prep["c3"], True)])[:, :c3_out]
        flat = h3.reshape(n, oh3 * ow3 * c3_out)      # NHWC flatten (fc1_w pre-permuted)
        layers = [(*prep["fc1"], True), (*prep["fc2"], False)]
        q = chain_matmul_pallas(flat, layers, out_dtype=jnp.float32)
    return q[:, :prep["n_actions"]]


# -------------------------------- references -------------------------------- #
def dqn_forward_ref_f32(params, x):
    def conv(h, w, b, s):
        y = jax.lax.conv_general_dilated(
            h, w, window_strides=(s, s), padding="VALID",
            dimension_numbers=("NCHW", "OIHW", "NCHW"))
        return jnp.maximum(y + b[None, :, None, None], 0.0)

    h = conv(x, params["conv1_w"], params["conv1_b"], 4)
    h = conv(h, params["conv2_w"], params["conv2_b"], 2)
    h = conv(h, params["conv3_w"], params["conv3_b"], 1)
    flat = h.reshape(h.shape[0], -1)
    h = jnp.maximum(flat @ params["fc1_w"] + params["fc1_b"], 0.0)
    return h @ params["fc2_w"] + params["fc2_b"]


def dqn_forward_ref_bf16(params, x):
    """Precision-matched reference: bf16 operands, f32 accumulate, bf16 activations."""
    bf = jnp.bfloat16

    def conv(h, w, b, s):
        y = jax.lax.conv_general_dilated(
            h.astype(bf), w.astype(bf), window_strides=(s, s), padding="VALID",
            dimension_numbers=("NCHW", "OIHW", "NCHW"),
            preferred_element_type=jnp.float32)
        return jnp.maximum(y + b[None, :, None, None], 0.0).astype(bf)

    h = conv(x, params["conv1_w"], params["conv1_b"], 4)
    h = conv(h, params["conv2_w"], params["conv2_b"], 2)
    h = conv(h, params["conv3_w"], params["conv3_b"], 1)
    flat = h.reshape(h.shape[0], -1)
    h1 = jnp.maximum(
        jnp.dot(flat.astype(bf), params["fc1_w"].astype(bf),
                preferred_element_type=jnp.float32) + params["fc1_b"], 0.0)
    return jnp.dot(h1.astype(bf), params["fc2_w"].astype(bf),
                   preferred_element_type=jnp.float32) + params["fc2_b"]


if __name__ == "__main__":
    # Small-but-valid spatial size: 36 -> conv1: 8 -> conv2: 3 -> conv3: 1
    batch, channels, height, width = 2, 4, 36, 36
    n_actions = 6
    conv_out_size = 64 * 1 * 1

    key = jax.random.PRNGKey(0)
    k_params, k_x = jax.random.split(key)
    params = init_dqn_params(k_params, channels, n_actions, conv_out_size)
    x = jax.random.normal(k_x, (batch, channels, height, width), jnp.float32)

    prep = prepare_params(params, (height, width))
    fwd = jax.jit(lambda inp: dqn_forward(prep, inp))   # prep closed over (static layout info)

    q = jax.block_until_ready(fwd(x))
    assert q.shape == (batch, n_actions)

    # Tight check against a precision-matched (bf16 matmul, f32 accumulate) reference.
    q_bf16_ref = dqn_forward_ref_bf16(params, x)
    assert jnp.allclose(q, q_bf16_ref, atol=1e-2, rtol=1e-2), "mismatch vs bf16-matched reference"

    # Loose sanity check against the full-f32 reference (bf16 inputs lose ~0.4% per op).
    q_f32_ref = dqn_forward_ref_f32(params, x)
    assert jnp.allclose(q, q_f32_ref, atol=1.5e-1, rtol=1e-1), "mismatch vs f32 reference"

    print("KERNEL_OK")
</pallas_src>

<mosaic_0001>
module attributes {stable_mosaic.version = 11 : i64} {
  func.func @_chain_matmul_kernel(%arg0: i32, %arg1: memref<128x256xbf16, #tpu.memory_space<vmem>>, %arg2: memref<256x128xbf16, #tpu.memory_space<vmem>>, %arg3: memref<1x128xf32, #tpu.memory_space<vmem>>, %arg4: memref<128x128xbf16, #tpu.memory_space<vmem>>) attributes {dimension_semantics = [#tpu.dimension_semantics<parallel>], iteration_bounds = array<i64: 1>, scalar_prefetch = 0 : i64, scratch_operands = 0 : i64, tpu.core_type = #tpu.core_type<tc>, window_params = [{transform_indices = @transform_0, window_bounds = array<i64: 128, 256>}, {pipeline_mode = #tpu.pipeline_mode<synchronous>, transform_indices = @transform_1, window_bounds = array<i64: 256, 128>}, {pipeline_mode = #tpu.pipeline_mode<synchronous>, transform_indices = @transform_2, window_bounds = array<i64: 1, 128>}, {transform_indices = @transform_3, window_bounds = array<i64: 128, 128>}]} {
    %c0 = arith.constant 0 : index
    %c0_0 = arith.constant 0 : index
    %0 = vector.load %arg1[%c0, %c0_0] : memref<128x256xbf16, #tpu.memory_space<vmem>>, vector<128x256xbf16>
    %c0_1 = arith.constant 0 : index
    %c0_2 = arith.constant 0 : index
    %1 = vector.load %arg2[%c0_1, %c0_2] : memref<256x128xbf16, #tpu.memory_space<vmem>>, vector<256x128xbf16>
    %c0_3 = arith.constant 0 : index
    %c0_4 = arith.constant 0 : index
    %2 = vector.load %arg3[%c0_3, %c0_4] : memref<1x128xf32, #tpu.memory_space<vmem>>, vector<1x128xf32>
    %cst = arith.constant dense<0.000000e+00> : vector<128x128xf32>
    %3 = tpu.matmul %0, %1, %cst {dimension_numbers = #tpu.dot_dimension_numbers<[1], [0], [0], [1], [0, 0, 1, 1], [], []>} : vector<128x256xbf16>, vector<256x128xbf16>, vector<128x128xf32> -> vector<128x128xf32>
    %4 = vector.broadcast %2 : vector<1x128xf32> to vector<128x128xf32>
    %5 = arith.addf %3, %4 : vector<128x128xf32>
    %cst_5 = arith.constant 0.000000e+00 : f32
    %6 = vector.broadcast %cst_5 : f32 to vector<128x128xf32>
    %7 = arith.maximumf %5, %6 : vector<128x128xf32>
    %8 = arith.truncf %7 : vector<128x128xf32> to vector<128x128xbf16>
    %c0_6 = arith.constant 0 : index
    %c0_7 = arith.constant 0 : index
    %9 = vector.load %arg4[%c0_6, %c0_7] : memref<128x128xbf16, #tpu.memory_space<vmem>>, vector<128x128xbf16>
    tpu.vector_store %arg4[%c0_6, %c0_7], %8 {strides = array<i32>} : memref<128x128xbf16, #tpu.memory_space<vmem>>, vector<128x128xbf16>,
    return
  }
  func.func @transform_0(%arg0: i32) -> (i32, i32) {
    %c0_i32 = arith.constant 0 : i32
    %c0_i32_0 = arith.constant 0 : i32
    return %arg0, %c0_i32 : i32, i32
  }
  func.func @transform_1(%arg0: i32) -> (i32, i32) {
    %c0_i32 = arith.constant 0 : i32
    %c0_i32_0 = arith.constant 0 : i32
    %c0_i32_1 = arith.constant 0 : i32
    return %c0_i32, %c0_i32_0 : i32, i32
  }
  func.func @transform_2(%arg0: i32) -> (i32, i32) {
    %c0_i32 = arith.constant 0 : i32
    %c0_i32_0 = arith.constant 0 : i32
    %c0_i32_1 = arith.constant 0 : i32
    return %c0_i32, %c0_i32_0 : i32, i32
  }
  func.func @transform_3(%arg0: i32) -> (i32, i32) {
    %c0_i32 = arith.constant 0 : i32
    %c0_i32_0 = arith.constant 0 : i32
    return %arg0, %c0_i32 : i32, i32
  }
}

module attributes {stable_mosaic.version = 11 : i64} {
  func.func @_chain_matmul_kernel(%arg0: i32, %arg1: memref<24x512xbf16, #tpu.memory_space<vmem>>, %arg2: memref<512x128xbf16, #tpu.memory_space<vmem>>, %arg3: memref<1x128xf32, #tpu.memory_space<vmem>>, %arg4: memref<24x128xbf16, #tpu.memory_space<vmem>>) attributes {dimension_semantics = [#tpu.dimension_semantics<parallel>], iteration_bounds = array<i64: 1>, scalar_prefetch = 0 : i64, scratch_operands = 0 : i64, tpu.core_type = #tpu.core_type<tc>, window_params = [{transform_indices = @transform_0, window_bounds = array<i64: 24, 512>}, {pipeline_mode = #tpu.pipeline_mode<synchronous>, transform_indices = @transform_1, window_bounds = array<i64: 512, 128>}, {pipeline_mode = #tpu.pipeline_mode<synchronous>, transform_indices = @transform_2, window_bounds = array<i64: 1, 128>}, {transform_indices = @transform_3, window_bounds = array<i64: 24, 128>}]} {
    %c0 = arith.constant 0 : index
    %c0_0 = arith.constant 0 : index
    %0 = vector.load %arg1[%c0, %c0_0] : memref<24x512xbf16, #tpu.memory_space<vmem>>, vector<24x512xbf16>
    %c0_1 = arith.constant 0 : index
    %c0_2 = arith.constant 0 : index
    %1 = vector.load %arg2[%c0_1, %c0_2] : memref<512x128xbf16, #tpu.memory_space<vmem>>, vector<512x128xbf16>
    %c0_3 = arith.constant 0 : index
    %c0_4 = arith.constant 0 : index
    %2 = vector.load %arg3[%c0_3, %c0_4] : memref<1x128xf32, #tpu.memory_space<vmem>>, vector<1x128xf32>
    %cst = arith.constant dense<0.000000e+00> : vector<24x128xf32>
    %3 = tpu.matmul %0, %1, %cst {dimension_numbers = #tpu.dot_dimension_numbers<[1], [0], [0], [1], [0, 0, 1, 1], [], []>} : vector<24x512xbf16>, vector<512x128xbf16>, vector<24x128xf32> -> vector<24x128xf32>
    %4 = vector.broadcast %2 : vector<1x128xf32> to vector<24x128xf32>
    %5 = arith.addf %3, %4 : vector<24x128xf32>
    %cst_5 = arith.constant 0.000000e+00 : f32
    %6 = vector.broadcast %cst_5 : f32 to vector<24x128xf32>
    %7 = arith.maximumf %5, %6 : vector<24x128xf32>
    %8 = arith.truncf %7 : vector<24x128xf32> to vector<24x128xbf16>
    %c0_6 = arith.constant 0 : index
    %c0_7 = arith.constant 0 : index
    %9 = vector.load %arg4[%c0_6, %c0_7] : memref<24x128xbf16, #tpu.memory_space<vmem>>, vector<24x128xbf16>
    tpu.vector_store %arg4[%c0_6, %c0_7], %8 {strides = array<i32>} : memref<24x128xbf16, #tpu.memory_space<vmem>>, vector<24x128xbf16>,
    return
  }
  func.func @transform_0(%arg0: i32) -> (i32, i32) {
    %c0_i32 = arith.constant 0 : i32
    %c0_i32_0 = arith.constant 0 : i32
    return %arg0, %c0_i32 : i32, i32
  }
  func.func @transform_1(%arg0: i32) -> (i32, i32) {
    %c0_i32 = arith.constant 0 : i32
    %c0_i32_0 = arith.constant 0 : i32
    %c0_i32_1 = arith.constant 0 : i32
    return %c0_i32, %c0_i32_0 : i32, i32
  }
  func.func @transform_2(%arg0: i32) -> (i32, i32) {
    %c0_i32 = arith.constant 0 : i32
    %c0_i32_0 = arith.constant 0 : i32
    %c0_i32_1 = arith.constant 0 : i32
    return %c0_i32, %c0_i32_0 : i32, i32
  }
  func.func @transform_3(%arg0: i32) -> (i32, i32) {
    %c0_i32 = arith.constant 0 : i32
    %c0_i32_0 = arith.constant 0 : i32
    return %arg0, %c0_i32 : i32, i32
  }
}

module attributes {stable_mosaic.version = 11 : i64} {
  func.func @_chain_matmul_kernel(%arg0: i32, %arg1: memref<8x576xbf16, #tpu.memory_space<vmem>>, %arg2: memref<576x64xbf16, #tpu.memory_space<vmem>>, %arg3: memref<1x64xf32, #tpu.memory_space<vmem>>, %arg4: memref<64x512xbf16, #tpu.memory_space<vmem>>, %arg5: memref<1x512xf32, #tpu.memory_space<vmem>>, %arg6: memref<512x128xbf16, #tpu.memory_space<vmem>>, %arg7: memref<1x128xf32, #tpu.memory_space<vmem>>, %arg8: memref<8x128xf32, #tpu.memory_space<vmem>>) attributes {dimension_semantics = [#tpu.dimension_semantics<parallel>], iteration_bounds = array<i64: 1>, scalar_prefetch = 0 : i64, scratch_operands = 0 : i64, tpu.core_type = #tpu.core_type<tc>, window_params = [{transform_indices = @transform_0, window_bounds = array<i64: 8, 576>}, {pipeline_mode = #tpu.pipeline_mode<synchronous>, transform_indices = @transform_1, window_bounds = array<i64: 576, 64>}, {pipeline_mode = #tpu.pipeline_mode<synchronous>, transform_indices = @transform_2, window_bounds = array<i64: 1, 64>}, {pipeline_mode = #tpu.pipeline_mode<synchronous>, transform_indices = @transform_3, window_bounds = array<i64: 64, 512>}, {pipeline_mode = #tpu.pipeline_mode<synchronous>, transform_indices = @transform_4, window_bounds = array<i64: 1, 512>}, {pipeline_mode = #tpu.pipeline_mode<synchronous>, transform_indices = @transform_5, window_bounds = array<i64: 512, 128>}, {pipeline_mode = #tpu.pipeline_mode<synchronous>, transform_indices = @transform_6, window_bounds = array<i64: 1, 128>}, {transform_indices = @transform_7, window_bounds = array<i64: 8, 128>}]} {
    %c0 = arith.constant 0 : index
    %c0_0 = arith.constant 0 : index
    %0 = vector.load %arg1[%c0, %c0_0] : memref<8x576xbf16, #tpu.memory_space<vmem>>, vector<8x576xbf16>
    %c0_1 = arith.constant 0 : index
    %c0_2 = arith.constant 0 : index
    %1 = vector.load %arg2[%c0_1, %c0_2] : memref<576x64xbf16, #tpu.memory_space<vmem>>, vector<576x64xbf16>
    %c0_3 = arith.constant 0 : index
    %c0_4 = arith.constant 0 : index
    %2 = vector.load %arg3[%c0_3, %c0_4] : memref<1x64xf32, #tpu.memory_space<vmem>>, vector<1x64xf32>
    %cst = arith.constant dense<0.000000e+00> : vector<8x64xf32>
    %3 = tpu.matmul %0, %1, %cst {dimension_numbers = #tpu.dot_dimension_numbers<[1], [0], [0], [1], [0, 0, 1, 1], [], []>} : vector<8x576xbf16>, vector<576x64xbf16>, vector<8x64xf32> -> vector<8x64xf32>
    %4 = vector.broadcast %2 : vector<1x64xf32> to vector<8x64xf32>
    %5 = arith.addf %3, %4 : vector<8x64xf32>
    %cst_5 = arith.constant 0.000000e+00 : f32
    %6 = vector.broadcast %cst_5 : f32 to vector<8x64xf32>
    %7 = arith.maximumf %5, %6 : vector<8x64xf32>
    %8 = arith.truncf %7 : vector<8x64xf32> to vector<8x64xbf16>
    %c0_6 = arith.constant 0 : index
    %c0_7 = arith.constant 0 : index
    %9 = vector.load %arg4[%c0_6, %c0_7] : memref<64x512xbf16, #tpu.memory_space<vmem>>, vector<64x512xbf16>
    %c0_8 = arith.constant 0 : index
    %c0_9 = arith.constant 0 : index
    %10 = vector.load %arg5[%c0_8, %c0_9] : memref<1x512xf32, #tpu.memory_space<vmem>>, vector<1x512xf32>
    %cst_10 = arith.constant dense<0.000000e+00> : vector<8x512xf32>
    %11 = tpu.matmul %8, %9, %cst_10 {dimension_numbers = #tpu.dot_dimension_numbers<[1], [0], [0], [1], [0, 0, 1, 1], [], []>} : vector<8x64xbf16>, vector<64x512xbf16>, vector<8x512xf32> -> vector<8x512xf32>
    %12 = vector.broadcast %10 : vector<1x512xf32> to vector<8x512xf32>
    %13 = arith.addf %11, %12 : vector<8x512xf32>
    %cst_11 = arith.constant 0.000000e+00 : f32
    %14 = vector.broadcast %cst_11 : f32 to vector<8x512xf32>
    %15 = arith.maximumf %13, %14 : vector<8x512xf32>
    %16 = arith.truncf %15 : vector<8x512xf32> to vector<8x512xbf16>
    %c0_12 = arith.constant 0 : index
    %c0_13 = arith.constant 0 : index
    %17 = vector.load %arg6[%c0_12, %c0_13] : memref<512x128xbf16, #tpu.memory_space<vmem>>, vector<512x128xbf16>
    %c0_14 = arith.constant 0 : index
    %c0_15 = arith.constant 0 : index
    %18 = vector.load %arg7[%c0_14, %c0_15] : memref<1x128xf32, #tpu.memory_space<vmem>>, vector<1x128xf32>
    %cst_16 = arith.constant dense<0.000000e+00> : vector<8x128xf32>
    %19 = tpu.matmul %16, %17, %cst_16 {dimension_numbers = #tpu.dot_dimension_numbers<[1], [0], [0], [1], [0, 0, 1, 1], [], []>} : vector<8x512xbf16>, vector<512x128xbf16>, vector<8x128xf32> -> vector<8x128xf32>
    %20 = vector.broadcast %18 : vector<1x128xf32> to vector<8x128xf32>
    %21 = arith.addf %19, %20 : vector<8x128xf32>
    %c0_17 = arith.constant 0 : index
    %c0_18 = arith.constant 0 : index
    %22 = vector.load %arg8[%c0_17, %c0_18] : memref<8x128xf32, #tpu.memory_space<vmem>>, vector<8x128xf32>
    tpu.vector_store %arg8[%c0_17, %c0_18], %21 {strides = array<i32>} : memref<8x128xf32, #tpu.memory_space<vmem>>, vector<8x128xf32>,
    return
  }
  func.func @transform_0(%arg0: i32) -> (i32, i32) {
    %c0_i32 = arith.constant 0 : i32
    %c0_i32_0 = arith.constant 0 : i32
    return %arg0, %c0_i32 : i32, i32
  }
  func.func @transform_1(%arg0: i32) -> (i32, i32) {
    %c0_i32 = arith.constant 0 : i32
    %c0_i32_0 = arith.constant 0 : i32
    %c0_i32_1 = arith.constant 0 : i32
    return %c0_i32, %c0_i32_0 : i32, i32
  }
  func.func @transform_2(%arg0: i32) -> (i32, i32) {
    %c0_i32 = arith.constant 0 : i32
    %c0_i32_0 = arith.constant 0 : i32
    %c0_i32_1 = arith.constant 0 : i32
    return %c0_i32, %c0_i32_0 : i32, i32
  }
  func.func @transform_3(%arg0: i32) -> (i32, i32) {
    %c0_i32 = arith.constant 0 : i32
    %c0_i32_0 = arith.constant 0 : i32
    %c0_i32_1 = arith.constant 0 : i32
    return %c0_i32, %c0_i32_0 : i32, i32
  }
  func.func @transform_4(%arg0: i32) -> (i32, i32) {
    %c0_i32 = arith.constant 0 : i32
    %c0_i32_0 = arith.constant 0 : i32
    %c0_i32_1 = arith.constant 0 : i32
    return %c0_i32, %c0_i32_0 : i32, i32
  }
  func.func @transform_5(%arg0: i32) -> (i32, i32) {
    %c0_i32 = arith.constant 0 : i32
    %c0_i32_0 = arith.constant 0 : i32
    %c0_i32_1 = arith.constant 0 : i32
    return %c0_i32, %c0_i32_0 : i32, i32
  }
  func.func @transform_6(%arg0: i32) -> (i32, i32) {
    %c0_i32 = arith.constant 0 : i32
    %c0_i32_0 = arith.constant 0 : i32
    %c0_i32_1 = arith.constant 0 : i32
    return %c0_i32, %c0_i32_0 : i32, i32
  }
  func.func @transform_7(%arg0: i32) -> (i32, i32) {
    %c0_i32 = arith.constant 0 : i32
    %c0_i32_0 = arith.constant 0 : i32
    return %arg0, %c0_i32 : i32, i32
  }
}

</mosaic_0001>

<llo_original>
// kernel: _lambda_.3
$region0: #{_lambda_.3}
  #allocation0 [shape = 'u32[]', space=smem, size = 0x4, offset = 0x4, fixed_abs, tag = 'smem constant byte address 0x4 - core index']
  #allocation1 [shape = 'u32[144,128]{1,0:T(1,128)}', space=vmem, size = 0x12000, scoped, tag = 'internal scratch']
  %s0 = inlined_call_operand.vmem [shape: bf16[128,256], index: 0, kind: input, shape index: {}]
  %s1 = inlined_call_operand.vmem [shape: bf16[256,128], index: 1, kind: input, shape index: {}]
  %s2 = inlined_call_operand.vmem [shape: f32[1,128], index: 2, kind: input, shape index: {}]
  %s3 = inlined_call_operand.vmem [shape: bf16[128,128], index: 3, kind: output, shape index: {}]
  %s4 = sld [smem:[#allocation0]]
  $region22: #{_lambda_.3} parent=0
    _
  %s6 = ssub.s32 1, %s4
  %s7 = scalar_select 0, %s6, %s4
  // Predicated region
  $region2: #{_lambda_.3} parent=0 // pred_check
    _
  $region3: #{_lambda_.3} parent=0 // pred_check_branch
    %9 = sbr.rel (0) target = $region5
  $region4: #{_lambda_.3} parent=0 // pred_region
    _
  $region5: #{_lambda_.3} parent=0 // pred_fallthru
    _
  // Predicated region
  $region6: #{_lambda_.3} parent=0 // pred_check
    _
  $region7: #{_lambda_.3} parent=0 // pred_check_branch
    %11 = sbr.rel (0) target = $region9
  $region8: #{_lambda_.3} parent=0 // pred_region
    _
  $region9: #{_lambda_.3} parent=0 // pred_fallthru
    _
  // Predicated region
  $region10: #{_lambda_.3} parent=0 // pred_check
    _
  $region11: #{_lambda_.3} parent=0 // pred_check_branch
    %13 = sbr.rel (0) target = $region13
  $region12: #{_lambda_.3} parent=0 // pred_region
    _
  $region13: #{_lambda_.3} parent=0 // pred_fallthru
    _
  %v15 = vld [vmem:[%s0] sm:$0xff]
  %v16 = vld [vmem:[%s0 + $0x8] sm:$0xff]
  %v17 = vld [vmem:[%s0 + $0x10] sm:$0xff]
  %v18 = vld [vmem:[%s0 + $0x18] sm:$0xff]
  %v19 = vld [vmem:[%s0 + $0x20] sm:$0xff]
  %v20 = vld [vmem:[%s0 + $0x28] sm:$0xff]
  %v21 = vld [vmem:[%s0 + $0x30] sm:$0xff]
  %v22 = vld [vmem:[%s0 + $0x38] sm:$0xff]
  %v23 = vld [vmem:[%s0 + $0x40] sm:$0xff]
  %v24 = vld [vmem:[%s0 + $0x48] sm:$0xff]
  %v25 = vld [vmem:[%s0 + $0x50] sm:$0xff]
  %v26 = vld [vmem:[%s0 + $0x58] sm:$0xff]
  %v27 = vld [vmem:[%s0 + $0x60] sm:$0xff]
  %v28 = vld [vmem:[%s0 + $0x68] sm:$0xff]
  %v29 = vld [vmem:[%s0 + $0x70] sm:$0xff]
  %v30 = vld [vmem:[%s0 + $0x78] sm:$0xff]
  %v31 = vld [vmem:[%s1] sm:$0xf]
  %v32 = vld [vmem:[%s1 + $0x4] sm:$0xf]
  %v33 = vld [vmem:[%s1 + $0x8] sm:$0xf]
  %v34 = vld [vmem:[%s1 + $0xc] sm:$0xf]
  %v35 = vld [vmem:[%s1 + $0x10] sm:$0xf]
  %v36 = vld [vmem:[%s1 + $0x14] sm:$0xf]
  %v37 = vld [vmem:[%s1 + $0x18] sm:$0xf]
  %v38 = vld [vmem:[%s1 + $0x1c] sm:$0xf]
  %v39 = vld [vmem:[%s1 + $0x20] sm:$0xf]
  %v40 = vld [vmem:[%s1 + $0x24] sm:$0xf]
  %v41 = vld [vmem:[%s1 + $0x28] sm:$0xf]
  %v42 = vld [vmem:[%s1 + $0x2c] sm:$0xf]
  %v43 = vld [vmem:[%s1 + $0x30] sm:$0xf]
  %v44 = vld [vmem:[%s1 + $0x34] sm:$0xf]
  %v45 = vld [vmem:[%s1 + $0x38] sm:$0xf]
  %v46 = vld [vmem:[%s1 + $0x3c] sm:$0xf]
  %v47 = vld [vmem:[%s1 + $0x40] sm:$0xf]
  %v48 = vld [vmem:[%s1 + $0x44] sm:$0xf]
  %v49 = vld [vmem:[%s1 + $0x48] sm:$0xf]
  %v50 = vld [vmem:[%s1 + $0x4c] sm:$0xf]
  %v51 = vld [vmem:[%s1 + $0x50] sm:$0xf]
  %v52 = vld [vmem:[%s1 + $0x54] sm:$0xf]
  %v53 = vld [vmem:[%s1 + $0x58] sm:$0xf]
  %v54 = vld [vmem:[%s1 + $0x5c] sm:$0xf]
  %v55 = vld [vmem:[%s1 + $0x60] sm:$0xf]
  %v56 = vld [vmem:[%s1 + $0x64] sm:$0xf]
  %v57 = vld [vmem:[%s1 + $0x68] sm:$0xf]
  %v58 = vld [vmem:[%s1 + $0x6c] sm:$0xf]
  %v59 = vld [vmem:[%s1 + $0x70] sm:$0xf]
  %v60 = vld [vmem:[%s1 + $0x74] sm:$0xf]
  %v61 = vld [vmem:[%s1 + $0x78] sm:$0xf]
  %v62 = vld [vmem:[%s1 + $0x7c] sm:$0xf]
  %v63 = vld [vmem:[%s2] sm:$0x1]
  %v65 = vlaneseq
  %v66 = vshrl.u32 %v65, 7
  %v67 = vsub.s32 0, %v66
  %v68 = vrot.slane %v63, %v67
  %v86 = vunpack.c.l.b16 %v15
  %v87 = vunpack.c.h.b16 %v15
  %v88 = vunpack.c.l.b16 %v16
  %v89 = vunpack.c.h.b16 %v16
  %v90 = vunpack.c.l.b16 %v17
  %v91 = vunpack.c.h.b16 %v17
  %v92 = vunpack.c.l.b16 %v18
  %v93 = vunpack.c.h.b16 %v18
  %v94 = vunpack.c.l.b16 %v19
  %v95 = vunpack.c.h.b16 %v19
  %v96 = vunpack.c.l.b16 %v20
  %v97 = vunpack.c.h.b16 %v20
  %v98 = vunpack.c.l.b16 %v21
  %v99 = vunpack.c.h.b16 %v21
  %v100 = vunpack.c.l.b16 %v22
  %v101 = vunpack.c.h.b16 %v22
  %v102 = vunpack.c.l.b16 %v23
  %v103 = vunpack.c.h.b16 %v23
  %v104 = vunpack.c.l.b16 %v24
  %v105 = vunpack.c.h.b16 %v24
  %v106 = vunpack.c.l.b16 %v25
  %v107 = vunpack.c.h.b16 %v25
  %v108 = vunpack.c.l.b16 %v26
  %v109 = vunpack.c.h.b16 %v26
  %v110 = vunpack.c.l.b16 %v27
  %v111 = vunpack.c.h.b16 %v27
  %v112 = vunpack.c.l.b16 %v28
  %v113 = vunpack.c.h.b16 %v28
  %v114 = vunpack.c.l.b16 %v29
  %v115 = vunpack.c.h.b16 %v29
  %v116 = vunpack.c.l.b16 %v30
  %v117 = vunpack.c.h.b16 %v30
  %v118 = vpack.c.b16 %v88, %v86
  %v119 = vpack.c.b16 %v89, %v87
  %v120 = vpack.c.b16 %v92, %v90
  %v121 = vpack.c.b16 %v93, %v91
  %v122 = vpack.c.b16 %v96, %v94
  %v123 = vpack.c.b16 %v97, %v95
  %v124 = vpack.c.b16 %v100, %v98
  %v125 = vpack.c.b16 %v101, %v99
  %v126 = vpack.c.b16 %v104, %v102
  %v127 = vpack.c.b16 %v105, %v103
  %v128 = vpack.c.b16 %v108, %v106
  %v129 = vpack.c.b16 %v109, %v107
  %v130 = vpack.c.b16 %v112, %v110
  %v131 = vpack.c.b16 %v113, %v111
  %v132 = vpack.c.b16 %v116, %v114
  %v133 = vpack.c.b16 %v117, %v115
  %v182 = vunpack.c.l.b16 %v31
  %v183 = vunpack.c.l.b16 %v32
  %v184 = vunpack.c.l.b16 %v33
  %v185 = vunpack.c.l.b16 %v34
  %v186 = vunpack.c.l.b16 %v35
  %v187 = vunpack.c.l.b16 %v36
  %v188 = vunpack.c.l.b16 %v37
  %v189 = vunpack.c.l.b16 %v38
  %v190 = vunpack.c.l.b16 %v39
  %v191 = vunpack.c.l.b16 %v40
  %v192 = vunpack.c.l.b16 %v41
  %v193 = vunpack.c.l.b16 %v42
  %v194 = vunpack.c.l.b16 %v43
  %v195 = vunpack.c.l.b16 %v44
  %v196 = vunpack.c.l.b16 %v45
  %v197 = vunpack.c.l.b16 %v46
  %v198 = vunpack.c.l.b16 %v47
  %v199 = vunpack.c.l.b16 %v48
  %v200 = vunpack.c.l.b16 %v49
  %v201 = vunpack.c.l.b16 %v50
  %v202 = vunpack.c.l.b16 %v51
  %v203 = vunpack.c.l.b16 %v52
  %v204 = vunpack.c.l.b16 %v53
  %v205 = vunpack.c.l.b16 %v54
  %v206 = vunpack.c.l.b16 %v55
  %v207 = vunpack.c.l.b16 %v56
  %v208 = vunpack.c.l.b16 %v57
  %v209 = vunpack.c.l.b16 %v58
  %v210 = vunpack.c.l.b16 %v59
  %v211 = vunpack.c.l.b16 %v60
  %v212 = vunpack.c.l.b16 %v61
  %v213 = vunpack.c.l.b16 %v62
  %v214 = vpack.c.b16 %v183, %v182
  %v215 = vpack.c.b16 %v185, %v184
  %v216 = vpack.c.b16 %v187, %v186
  %v217 = vpack.c.b16 %v189, %v188
  %v218 = vpack.c.b16 %v191, %v190
  %v219 = vpack.c.b16 %v193, %v192
  %v220 = vpack.c.b16 %v195, %v194
  %v221 = vpack.c.b16 %v197, %v196
  %v222 = vpack.c.b16 %v199, %v198
  %v223 = vpack.c.b16 %v201, %v200
  %v224 = vpack.c.b16 %v203, %v202
  %v225 = vpack.c.b16 %v205, %v204
  %v226 = vpack.c.b16 %v207, %v206
  %v227 = vpack.c.b16 %v209, %v208
  %v228 = vpack.c.b16 %v211, %v210
  %v229 = vpack.c.b16 %v213, %v212
  %246 = vmatprep.subr.bf16.mxu0 0
  %247 = vmatpush1.bf16.msra.mxu0 %v214
  %248 = vmatprep.subr.bf16.mxu0 0
  %249 = vmatpush1.bf16.msra.mxu0 %v215
  %250 = vmatprep.subr.bf16.mxu0 0
  %251 = vmatpush1.bf16.msra.mxu0 %v216
  %252 = vmatprep.subr.bf16.mxu0 0
  %253 = vmatpush1.bf16.msra.mxu0 %v217
  %254 = vmatprep.subr.bf16.mxu0 0
  %255 = vmatpush1.bf16.msra.mxu0 %v218
  %256 = vmatprep.subr.bf16.mxu0 0
  %257 = vmatpush1.bf16.msra.mxu0 %v219
  %258 = vmatprep.subr.bf16.mxu0 0
  %259 = vmatpush1.bf16.msra.mxu0 %v220
  %260 = vmatprep.subr.bf16.mxu0 0
  %261 = vmatpush1.bf16.msra.mxu0 %v221
  %262 = vmatprep.subr.bf16.mxu0 0
  %263 = vmatpush1.bf16.msra.mxu0 %v222
  %264 = vmatprep.subr.bf16.mxu0 0
  %265 = vmatpush1.bf16.msra.mxu0 %v223
  %266 = vmatprep.subr.bf16.mxu0 0
  %267 = vmatpush1.bf16.msra.mxu0 %v224
  %268 = vmatprep.subr.bf16.mxu0 0
  %269 = vmatpush1.bf16.msra.mxu0 %v225
  %270 = vmatprep.subr.bf16.mxu0 0
  %271 = vmatpush1.bf16.msra.mxu0 %v226
  %272 = vmatprep.subr.bf16.mxu0 0
  %273 = vmatpush1.bf16.msra.mxu0 %v227
  %274 = vmatprep.subr.bf16.mxu0 0
  %275 = vmatpush1.bf16.msra.mxu0 %v228
  %276 = vmatprep.subr.bf16.mxu0 0
  %277 = vmatpush1.bf16.msra.mxu0 %v229
  %278 = vmatprep.mubr.bf16.mxu0 %v119
  %279 = vmatmul.mubr.bf16.gmra.mrb[0].mxu0 %v118
  %v280 = vpop.f32.mrb[0].mxu0
  %v281 = vadd.f32 %v68, %v280
  %v282 = vpop.f32.mrb[0].mxu0
  %v283 = vpop.f32.mrb[0].mxu0
  %v284 = vadd.f32 %v68, %v283
  %v285 = vpop.f32.mrb[0].mxu0
  %286 = vmatprep.mubr.bf16.mxu0 %v121
  %287 = vmatmul.mubr.bf16.gmra.mrb[0].mxu0 %v120
  %v288 = vpop.f32.mrb[0].mxu0
  %v289 = vadd.f32 %v68, %v288
  %v290 = vpop.f32.mrb[0].mxu0
  %v291 = vpop.f32.mrb[0].mxu0
  %v292 = vadd.f32 %v68, %v291
  %v293 = vpop.f32.mrb[0].mxu0
  %294 = vmatprep.mubr.bf16.mxu0 %v123
  %295 = vmatmul.mubr.bf16.gmra.mrb[0].mxu0 %v122
  %v296 = vpop.f32.mrb[0].mxu0
  %v297 = vadd.f32 %v68, %v296
  %v298 = vpop.f32.mrb[0].mxu0
  %v299 = vpop.f32.mrb[0].mxu0
  %v300 = vadd.f32 %v68, %v299
  %v301 = vpop.f32.mrb[0].mxu0
  %302 = vmatprep.mubr.bf16.mxu0 %v125
  %303 = vmatmul.mubr.bf16.gmra.mrb[0].mxu0 %v124
  %v304 = vpop.f32.mrb[0].mxu0
  %v305 = vadd.f32 %v68, %v304
  %v306 = vpop.f32.mrb[0].mxu0
  %v307 = vpop.f32.mrb[0].mxu0
  %v308 = vadd.f32 %v68, %v307
  %v309 = vpop.f32.mrb[0].mxu0
  %310 = vmatprep.mubr.bf16.mxu0 %v127
  %311 = vmatmul.mubr.bf16.gmra.mrb[0].mxu0 %v126
  %v312 = vpop.f32.mrb[0].mxu0
  %v313 = vadd.f32 %v68, %v312
  %v314 = vpop.f32.mrb[0].mxu0
  %v315 = vpop.f32.mrb[0].mxu0
  %v316 = vadd.f32 %v68, %v315
  %v317 = vpop.f32.mrb[0].mxu0
  %318 = vmatprep.mubr.bf16.mxu0 %v129
  %319 = vmatmul.mubr.bf16.gmra.mrb[0].mxu0 %v128
  %v320 = vpop.f32.mrb[0].mxu0
  %v321 = vadd.f32 %v68, %v320
  %v322 = vpop.f32.mrb[0].mxu0
  %v323 = vpop.f32.mrb[0].mxu0
  %v324 = vadd.f32 %v68, %v323
  %v325 = vpop.f32.mrb[0].mxu0
  %326 = vmatprep.mubr.bf16.mxu0 %v131
  %327 = vmatmul.mubr.bf16.gmra.mrb[0].mxu0 %v130
  %v328 = vpop.f32.mrb[0].mxu0
  %v329 = vadd.f32 %v68, %v328
  %v330 = vpop.f32.mrb[0].mxu0
  %v331 = vpop.f32.mrb[0].mxu0
  %v332 = vadd.f32 %v68, %v331
  %v333 = vpop.f32.mrb[0].mxu0
  %334 = vmatprep.mubr.bf16.mxu0 %v133
  %335 = vmatmul.mubr.bf16.gmra.mrb[0].mxu0 %v132
  %v336 = vpop.f32.mrb[0].mxu0
  %v337 = vadd.f32 %v68, %v336
  %v338 = vpop.f32.mrb[0].mxu0
  %v339 = vpop.f32.mrb[0].mxu0
  %v340 = vadd.f32 %v68, %v339
  %v341 = vpop.f32.mrb[0].mxu0
  %342 = vdwg.mxu0
  %v343 = vmax.f32 %v281, 0.0
  %v344 = vmax.f32 %v284, 0.0
  %v345 = vmax.f32 %v289, 0.0
  %v346 = vmax.f32 %v292, 0.0
  %v347 = vmax.f32 %v297, 0.0
  %v348 = vmax.f32 %v300, 0.0
  %v349 = vmax.f32 %v305, 0.0
  %v350 = vmax.f32 %v308, 0.0
  %v351 = vmax.f32 %v313, 0.0
  %v352 = vmax.f32 %v316, 0.0
  %v353 = vmax.f32 %v321, 0.0
  %v354 = vmax.f32 %v324, 0.0
  %v355 = vmax.f32 %v329, 0.0
  %v356 = vmax.f32 %v332, 0.0
  %v357 = vmax.f32 %v337, 0.0
  %v358 = vmax.f32 %v340, 0.0
  %v359 = vpack.c.bf16 %v344, %v343
  %v360 = vpack.c.bf16 %v346, %v345
  %v361 = vpack.c.bf16 %v348, %v347
  %v362 = vpack.c.bf16 %v350, %v349
  %v363 = vpack.c.bf16 %v352, %v351
  %v364 = vpack.c.bf16 %v354, %v353
  %v365 = vpack.c.bf16 %v356, %v355
  %v366 = vpack.c.bf16 %v358, %v357
  %v375 = vunpack.c.l.b16 %v359
  %v376 = vunpack.c.h.b16 %v359
  %v377 = vunpack.c.l.b16 %v360
  %v378 = vunpack.c.h.b16 %v360
  %v379 = vunpack.c.l.b16 %v361
  %v380 = vunpack.c.h.b16 %v361
  %v381 = vunpack.c.l.b16 %v362
  %v382 = vunpack.c.h.b16 %v362
  %v383 = vunpack.c.l.b16 %v363
  %v384 = vunpack.c.h.b16 %v363
  %v385 = vunpack.c.l.b16 %v364
  %v386 = vunpack.c.h.b16 %v364
  %v387 = vunpack.c.l.b16 %v365
  %v388 = vunpack.c.h.b16 %v365
  %v389 = vunpack.c.l.b16 %v366
  %v390 = vunpack.c.h.b16 %v366
  %v391 = vpack.c.b16 %v375, %v375
  %v392 = vpack.c.b16 %v376, %v376
  %v393 = vpack.c.b16 %v377, %v377
  %v394 = vpack.c.b16 %v378, %v378
  %v395 = vpack.c.b16 %v379, %v379
  %v396 = vpack.c.b16 %v380, %v380
  %v397 = vpack.c.b16 %v381, %v381
  %v398 = vpack.c.b16 %v382, %v382
  %v399 = vpack.c.b16 %v383, %v383
  %v400 = vpack.c.b16 %v384, %v384
  %v401 = vpack.c.b16 %v385, %v385
  %v402 = vpack.c.b16 %v386, %v386
  %v403 = vpack.c.b16 %v387, %v387
  %v404 = vpack.c.b16 %v388, %v388
  %v405 = vpack.c.b16 %v389, %v389
  %v406 = vpack.c.b16 %v390, %v390
  %423 = vst [vmem:[%s3] sm:$0xf] %v391
  %424 = vst [vmem:[%s3 + $0x4] sm:$0xf] %v392
  %425 = vst [vmem:[%s3 + $0x8] sm:$0xf] %v393
  %426 = vst [vmem:[%s3 + $0xc] sm:$0xf] %v394
  %427 = vst [vmem:[%s3 + $0x10] sm:$0xf] %v395
  %428 = vst [vmem:[%s3 + $0x14] sm:$0xf] %v396
  %429 = vst [vmem:[%s3 + $0x18] sm:$0xf] %v397
  %430 = vst [vmem:[%s3 + $0x1c] sm:$0xf] %v398
  %431 = vst [vmem:[%s3 + $0x20] sm:$0xf] %v399
  %432 = vst [vmem:[%s3 + $0x24] sm:$0xf] %v400
  %433 = vst [vmem:[%s3 + $0x28] sm:$0xf] %v401
  %434 = vst [vmem:[%s3 + $0x2c] sm:$0xf] %v402
  %435 = vst [vmem:[%s3 + $0x30] sm:$0xf] %v403
  %436 = vst [vmem:[%s3 + $0x34] sm:$0xf] %v404
  %437 = vst [vmem:[%s3 + $0x38] sm:$0xf] %v405
  %438 = vst [vmem:[%s3 + $0x3c] sm:$0xf] %v406
  // Predicated region
  $region14: #{_lambda_.3} parent=0 // pred_check
    _
  $region15: #{_lambda_.3} parent=0 // pred_check_branch
    %440 = sbr.rel (0) target = $region17
  $region16: #{_lambda_.3} parent=0 // pred_region
    _
  $region17: #{_lambda_.3} parent=0 // pred_fallthru
    _
  // Predicated region
  $region18: #{_lambda_.3} parent=0 // pred_check
    _
  $region19: #{_lambda_.3} parent=0 // pred_check_branch
    %442 = sbr.rel (0) target = $region21
  $region20: #{_lambda_.3} parent=0 // pred_region
    _
  $region21: #{_lambda_.3} parent=0 // pred_fallthru
    _

// kernel: _lambda_.4
$region0: #{_lambda_.4}
  #allocation0 [shape = 'u32[]', space=smem, size = 0x4, offset = 0x4, fixed_abs, tag = 'smem constant byte address 0x4 - core index']
  #allocation1 [shape = 'u32[144,128]{1,0:T(1,128)}', space=vmem, size = 0x12000, scoped, tag = 'internal scratch']
  %s0 = inlined_call_operand.vmem [shape: bf16[24,512], index: 0, kind: input, shape index: {}]
  %s1 = inlined_call_operand.vmem [shape: bf16[512,128], index: 1, kind: input, shape index: {}]
  %s2 = inlined_call_operand.vmem [shape: f32[1,128], index: 2, kind: input, shape index: {}]
  %s3 = inlined_call_operand.vmem [shape: bf16[24,128], index: 3, kind: output, shape index: {}]
  %s4 = sld [smem:[#allocation0]]
  $region22: #{_lambda_.4} parent=0
    _
  %s6 = ssub.s32 1, %s4
  %s7 = scalar_select 0, %s6, %s4
  // Predicated region
  $region2: #{_lambda_.4} parent=0 // pred_check
    _
  $region3: #{_lambda_.4} parent=0 // pred_check_branch
    %9 = sbr.rel (0) target = $region5
  $region4: #{_lambda_.4} parent=0 // pred_region
    _
  $region5: #{_lambda_.4} parent=0 // pred_fallthru
    _
  // Predicated region
  $region6: #{_lambda_.4} parent=0 // pred_check
    _
  $region7: #{_lambda_.4} parent=0 // pred_check_branch
    %11 = sbr.rel (0) target = $region9
  $region8: #{_lambda_.4} parent=0 // pred_region
    _
  $region9: #{_lambda_.4} parent=0 // pred_fallthru
    _
  // Predicated region
  $region10: #{_lambda_.4} parent=0 // pred_check
    _
  $region11: #{_lambda_.4} parent=0 // pred_check_branch
    %13 = sbr.rel (0) target = $region13
  $region12: #{_lambda_.4} parent=0 // pred_region
    _
  $region13: #{_lambda_.4} parent=0 // pred_fallthru
    _
  %v15 = vld [vmem:[%s0] sm:$0xff]
  %v16 = vld [vmem:[%s0 + $0x8] sm:$0xff]
  %v17 = vld [vmem:[%s0 + $0x10] sm:$0xff]
  %v18 = vld [vmem:[%s0 + $0x18] sm:$0xff]
  %v19 = vld [vmem:[%s0 + $0x20] sm:$0xff]
  %v20 = vld [vmem:[%s0 + $0x28] sm:$0xff]
  %v21 = vld [vmem:[%s1] sm:$0xf]
  %v22 = vld [vmem:[%s1 + $0x4] sm:$0xf]
  %v23 = vld [vmem:[%s1 + $0x8] sm:$0xf]
  %v24 = vld [vmem:[%s1 + $0xc] sm:$0xf]
  %v25 = vld [vmem:[%s1 + $0x10] sm:$0xf]
  %v26 = vld [vmem:[%s1 + $0x14] sm:$0xf]
  %v27 = vld [vmem:[%s1 + $0x18] sm:$0xf]
  %v28 = vld [vmem:[%s1 + $0x1c] sm:$0xf]
  %v29 = vld [vmem:[%s1 + $0x20] sm:$0xf]
  %v30 = vld [vmem:[%s1 + $0x24] sm:$0xf]
  %v31 = vld [vmem:[%s1 + $0x28] sm:$0xf]
  %v32 = vld [vmem:[%s1 + $0x2c] sm:$0xf]
  %v33 = vld [vmem:[%s1 + $0x30] sm:$0xf]
  %v34 = vld [vmem:[%s1 + $0x34] sm:$0xf]
  %v35 = vld [vmem:[%s1 + $0x38] sm:$0xf]
  %v36 = vld [vmem:[%s1 + $0x3c] sm:$0xf]
  %v37 = vld [vmem:[%s1 + $0x40] sm:$0xf]
  %v38 = vld [vmem:[%s1 + $0x44] sm:$0xf]
  %v39 = vld [vmem:[%s1 + $0x48] sm:$0xf]
  %v40 = vld [vmem:[%s1 + $0x4c] sm:$0xf]
  %v41 = vld [vmem:[%s1 + $0x50] sm:$0xf]
  %v42 = vld [vmem:[%s1 + $0x54] sm:$0xf]
  %v43 = vld [vmem:[%s1 + $0x58] sm:$0xf]
  %v44 = vld [vmem:[%s1 + $0x5c] sm:$0xf]
  %v45 = vld [vmem:[%s1 + $0x60] sm:$0xf]
  %v46 = vld [vmem:[%s1 + $0x64] sm:$0xf]
  %v47 = vld [vmem:[%s1 + $0x68] sm:$0xf]
  %v48 = vld [vmem:[%s1 + $0x6c] sm:$0xf]
  %v49 = vld [vmem:[%s1 + $0x70] sm:$0xf]
  %v50 = vld [vmem:[%s1 + $0x74] sm:$0xf]
  %v51 = vld [vmem:[%s1 + $0x78] sm:$0xf]
  %v52 = vld [vmem:[%s1 + $0x7c] sm:$0xf]
  %v53 = vld [vmem:[%s1 + $0x80] sm:$0xf]
  %v54 = vld [vmem:[%s1 + $0x84] sm:$0xf]
  %v55 = vld [vmem:[%s1 + $0x88] sm:$0xf]
  %v56 = vld [vmem:[%s1 + $0x8c] sm:$0xf]
  %v57 = vld [vmem:[%s1 + $0x90] sm:$0xf]
  %v58 = vld [vmem:[%s1 + $0x94] sm:$0xf]
  %v59 = vld [vmem:[%s1 + $0x98] sm:$0xf]
  %v60 = vld [vmem:[%s1 + $0x9c] sm:$0xf]
  %v61 = vld [vmem:[%s1 + $0xa0] sm:$0xf]
  %v62 = vld [vmem:[%s1 + $0xa4] sm:$0xf]
  %v63 = vld [vmem:[%s1 + $0xa8] sm:$0xf]
  %v64 = vld [vmem:[%s1 + $0xac] sm:$0xf]
  %v65 = vld [vmem:[%s1 + $0xb0] sm:$0xf]
  %v66 = vld [vmem:[%s1 + $0xb4] sm:$0xf]
  %v67 = vld [vmem:[%s1 + $0xb8] sm:$0xf]
  %v68 = vld [vmem:[%s1 + $0xbc] sm:$0xf]
  %v69 = vld [vmem:[%s1 + $0xc0] sm:$0xf]
  %v70 = vld [vmem:[%s1 + $0xc4] sm:$0xf]
  %v71 = vld [vmem:[%s1 + $0xc8] sm:$0xf]
  %v72 = vld [vmem:[%s1 + $0xcc] sm:$0xf]
  %v73 = vld [vmem:[%s1 + $0xd0] sm:$0xf]
  %v74 = vld [vmem:[%s1 + $0xd4] sm:$0xf]
  %v75 = vld [vmem:[%s1 + $0xd8] sm:$0xf]
  %v76 = vld [vmem:[%s1 + $0xdc] sm:$0xf]
  %v77 = vld [vmem:[%s1 + $0xe0] sm:$0xf]
  %v78 = vld [vmem:[%s1 + $0xe4] sm:$0xf]
  %v79 = vld [vmem:[%s1 + $0xe8] sm:$0xf]
  %v80 = vld [vmem:[%s1 + $0xec] sm:$0xf]
  %v81 = vld [vmem:[%s1 + $0xf0] sm:$0xf]
  %v82 = vld [vmem:[%s1 + $0xf4] sm:$0xf]
  %v83 = vld [vmem:[%s1 + $0xf8] sm:$0xf]
  %v84 = vld [vmem:[%s1 + $0xfc] sm:$0xf]
  %v85 = vld [vmem:[%s2] sm:$0x1]
  %v87 = vlaneseq
  %v88 = vshrl.u32 %v87, 7
  %v89 = vsub.s32 0, %v88
  %v90 = vrot.slane %v85, %v89
  %v98 = vunpack.c.l.b16 %v15
  %v99 = vunpack.c.h.b16 %v15
  %v100 = vunpack.c.l.b16 %v16
  %v101 = vunpack.c.h.b16 %v16
  %v102 = vunpack.c.l.b16 %v17
  %v103 = vunpack.c.h.b16 %v17
  %v104 = vunpack.c.l.b16 %v18
  %v105 = vunpack.c.h.b16 %v18
  %v106 = vunpack.c.l.b16 %v19
  %v107 = vunpack.c.h.b16 %v19
  %v108 = vunpack.c.l.b16 %v20
  %v109 = vunpack.c.h.b16 %v20
  %v110 = vpack.c.b16 %v102, %v98
  %v111 = vpack.c.b16 %v103, %v99
  %v112 = vpack.c.b16 %v104, %v100
  %v113 = vpack.c.b16 %v105, %v101
  %v114 = vpack.c.b16 %v106, %v106
  %v115 = vpack.c.b16 %v107, %v107
  %v116 = vpack.c.b16 %v108, %v108
  %v117 = vpack.c.b16 %v109, %v109
  %v190 = vunpack.c.l.b16 %v21
  %v191 = vunpack.c.l.b16 %v22
  %v192 = vunpack.c.l.b16 %v23
  %v193 = vunpack.c.l.b16 %v24
  %v194 = vunpack.c.l.b16 %v25
  %v195 = vunpack.c.l.b16 %v26
  %v196 = vunpack.c.l.b16 %v27
  %v197 = vunpack.c.l.b16 %v28
  %v198 = vunpack.c.l.b16 %v29
  %v199 = vunpack.c.l.b16 %v30
  %v200 = vunpack.c.l.b16 %v31
  %v201 = vunpack.c.l.b16 %v32
  %v202 = vunpack.c.l.b16 %v33
  %v203 = vunpack.c.l.b16 %v34
  %v204 = vunpack.c.l.b16 %v35
  %v205 = vunpack.c.l.b16 %v36
  %v206 = vunpack.c.l.b16 %v37
  %v207 = vunpack.c.l.b16 %v38
  %v208 = vunpack.c.l.b16 %v39
  %v209 = vunpack.c.l.b16 %v40
  %v210 = vunpack.c.l.b16 %v41
  %v211 = vunpack.c.l.b16 %v42
  %v212 = vunpack.c.l.b16 %v43
  %v213 = vunpack.c.l.b16 %v44
  %v214 = vunpack.c.l.b16 %v45
  %v215 = vunpack.c.l.b16 %v46
  %v216 = vunpack.c.l.b16 %v47
  %v217 = vunpack.c.l.b16 %v48
  %v218 = vunpack.c.l.b16 %v49
  %v219 = vunpack.c.l.b16 %v50
  %v220 = vunpack.c.l.b16 %v51
  %v221 = vunpack.c.l.b16 %v52
  %v222 = vunpack.c.l.b16 %v53
  %v223 = vunpack.c.l.b16 %v54
  %v224 = vunpack.c.l.b16 %v55
  %v225 = vunpack.c.l.b16 %v56
  %v226 = vunpack.c.l.b16 %v57
  %v227 = vunpack.c.l.b16 %v58
  %v228 = vunpack.c.l.b16 %v59
  %v229 = vunpack.c.l.b16 %v60
  %v230 = vunpack.c.l.b16 %v61
  %v231 = vunpack.c.l.b16 %v62
  %v232 = vunpack.c.l.b16 %v63
  %v233 = vunpack.c.l.b16 %v64
  %v234 = vunpack.c.l.b16 %v65
  %v235 = vunpack.c.l.b16 %v66
  %v236 = vunpack.c.l.b16 %v67
  %v237 = vunpack.c.l.b16 %v68
  %v238 = vunpack.c.l.b16 %v69
  %v239 = vunpack.c.l.b16 %v70
  %v240 = vunpack.c.l.b16 %v71
  %v241 = vunpack.c.l.b16 %v72
  %v242 = vunpack.c.l.b16 %v73
  %v243 = vunpack.c.l.b16 %v74
  %v244 = vunpack.c.l.b16 %v75
  %v245 = vunpack.c.l.b16 %v76
  %v246 = vunpack.c.l.b16 %v77
  %v247 = vunpack.c.l.b16 %v78
  %v248 = vunpack.c.l.b16 %v79
  %v249 = vunpack.c.l.b16 %v80
  %v250 = vunpack.c.l.b16 %v81
  %v251 = vunpack.c.l.b16 %v82
  %v252 = vunpack.c.l.b16 %v83
  %v253 = vunpack.c.l.b16 %v84
  %v254 = vpack.c.b16 %v191, %v190
  %v255 = vpack.c.b16 %v193, %v192
  %v256 = vpack.c.b16 %v195, %v194
  %v257 = vpack.c.b16 %v197, %v196
  %v258 = vpack.c.b16 %v199, %v198
  %v259 = vpack.c.b16 %v201, %v200
  %v260 = vpack.c.b16 %v203, %v202
  %v261 = vpack.c.b16 %v205, %v204
  %v262 = vpack.c.b16 %v207, %v206
  %v263 = vpack.c.b16 %v209, %v208
  %v264 = vpack.c.b16 %v211, %v210
  %v265 = vpack.c.b16 %v213, %v212
  %v266 = vpack.c.b16 %v215, %v214
  %v267 = vpack.c.b16 %v217, %v216
  %v268 = vpack.c.b16 %v219, %v218
  %v269 = vpack.c.b16 %v221, %v220
  %v270 = vpack.c.b16 %v223, %v222
  %v271 = vpack.c.b16 %v225, %v224
  %v272 = vpack.c.b16 %v227, %v226
  %v273 = vpack.c.b16 %v229, %v228
  %v274 = vpack.c.b16 %v231, %v230
  %v275 = vpack.c.b16 %v233, %v232
  %v276 = vpack.c.b16 %v235, %v234
  %v277 = vpack.c.b16 %v237, %v236
  %v278 = vpack.c.b16 %v239, %v238
  %v279 = vpack.c.b16 %v241, %v240
  %v280 = vpack.c.b16 %v243, %v242
  %v281 = vpack.c.b16 %v245, %v244
  %v282 = vpack.c.b16 %v247, %v246
  %v283 = vpack.c.b16 %v249, %v248
  %v284 = vpack.c.b16 %v251, %v250
  %v285 = vpack.c.b16 %v253, %v252
  %318 = vmatprep.subr.bf16.mxu0 0
  %319 = vmatpush1.bf16.msra.mxu0 %v254
  %320 = vmatprep.subr.bf16.mxu0 0
  %321 = vmatpush1.bf16.msra.mxu0 %v255
  %322 = vmatprep.subr.bf16.mxu0 0
  %323 = vmatpush1.bf16.msra.mxu0 %v256
  %324 = vmatprep.subr.bf16.mxu0 0
  %325 = vmatpush1.bf16.msra.mxu0 %v257
  %326 = vmatprep.subr.bf16.mxu0 0
  %327 = vmatpush1.bf16.msra.mxu0 %v258
  %328 = vmatprep.subr.bf16.mxu0 0
  %329 = vmatpush1.bf16.msra.mxu0 %v259
  %330 = vmatprep.subr.bf16.mxu0 0
  %331 = vmatpush1.bf16.msra.mxu0 %v260
  %332 = vmatprep.subr.bf16.mxu0 0
  %333 = vmatpush1.bf16.msra.mxu0 %v261
  %334 = vmatprep.subr.bf16.mxu0 0
  %335 = vmatpush1.bf16.msra.mxu0 %v262
  %336 = vmatprep.subr.bf16.mxu0 0
  %337 = vmatpush1.bf16.msra.mxu0 %v263
  %338 = vmatprep.subr.bf16.mxu0 0
  %339 = vmatpush1.bf16.msra.mxu0 %v264
  %340 = vmatprep.subr.bf16.mxu0 0
  %341 = vmatpush1.bf16.msra.mxu0 %v265
  %342 = vmatprep.subr.bf16.mxu0 0
  %343 = vmatpush1.bf16.msra.mxu0 %v266
  %344 = vmatprep.subr.bf16.mxu0 0
  %345 = vmatpush1.bf16.msra.mxu0 %v267
  %346 = vmatprep.subr.bf16.mxu0 0
  %347 = vmatpush1.bf16.msra.mxu0 %v268
  %348 = vmatprep.subr.bf16.mxu0 0
  %349 = vmatpush1.bf16.msra.mxu0 %v269
  %350 = vmatprep.mubr.bf16.mxu0 %v111
  %351 = vmatmul.mubr.bf16.gmra.mrb[0].mxu0 %v110
  %v352 = vpop.f32.mrb[0].mxu0
  %v353 = vadd.f32 %v90, %v352
  %v354 = vpop.f32.mrb[0].mxu0
  %v355 = vpop.f32.mrb[0].mxu0
  %v356 = vadd.f32 %v90, %v355
  %v357 = vpop.f32.mrb[0].mxu0
  %358 = vmatprep.mubr.bf16.mxu0 %v115
  %359 = vmatmul.mubr.bf16.gmra.mrb[0].mxu0 %v114
  %v360 = vpop.f32.mrb[0].mxu0
  %v361 = vadd.f32 %v90, %v360
  %v362 = vpop.f32.mrb[0].mxu0
  %v363 = vpop.f32.mrb[0].mxu0
  %v364 = vpop.f32.mrb[0].mxu0
  %365 = vdwg.mxu0
  %366 = vmatprep.subr.bf16.mxu0 0
  %367 = vmatpush1.bf16.msra.mxu0 %v270
  %368 = vmatprep.subr.bf16.mxu0 0
  %369 = vmatpush1.bf16.msra.mxu0 %v271
  %370 = vmatprep.subr.bf16.mxu0 0
  %371 = vmatpush1.bf16.msra.mxu0 %v272
  %372 = vmatprep.subr.bf16.mxu0 0
  %373 = vmatpush1.bf16.msra.mxu0 %v273
  %374 = vmatprep.subr.bf16.mxu0 0
  %375 = vmatpush1.bf16.msra.mxu0 %v274
  %376 = vmatprep.subr.bf16.mxu0 0
  %377 = vmatpush1.bf16.msra.mxu0 %v275
  %378 = vmatprep.subr.bf16.mxu0 0
  %379 = vmatpush1.bf16.msra.mxu0 %v276
  %380 = vmatprep.subr.bf16.mxu0 0
  %381 = vmatpush1.bf16.msra.mxu0 %v277
  %382 = vmatprep.subr.bf16.mxu0 0
  %383 = vmatpush1.bf16.msra.mxu0 %v278
  %384 = vmatprep.subr.bf16.mxu0 0
  %385 = vmatpush1.bf16.msra.mxu0 %v279
  %386 = vmatprep.subr.bf16.mxu0 0
  %387 = vmatpush1.bf16.msra.mxu0 %v280
  %388 = vmatprep.subr.bf16.mxu0 0
  %389 = vmatpush1.bf16.msra.mxu0 %v281
  %390 = vmatprep.subr.bf16.mxu0 0
  %391 = vmatpush1.bf16.msra.mxu0 %v282
  %392 = vmatprep.subr.bf16.mxu0 0
  %393 = vmatpush1.bf16.msra.mxu0 %v283
  %394 = vmatprep.subr.bf16.mxu0 0
  %395 = vmatpush1.bf16.msra.mxu0 %v284
  %396 = vmatprep.subr.bf16.mxu0 0
  %397 = vmatpush1.bf16.msra.mxu0 %v285
  %398 = vmatprep.mubr.bf16.mxu0 %v113
  %399 = vmatmul.mubr.bf16.gmra.mrb[0].mxu0 %v112
  %v400 = vpop.f32.mrb[0].mxu0
  %v401 = vadd.f32 %v353, %v400
  %v402 = vpop.f32.mrb[0].mxu0
  %v403 = vpop.f32.mrb[0].mxu0
  %v404 = vadd.f32 %v356, %v403
  %v405 = vpop.f32.mrb[0].mxu0
  %406 = vmatprep.mubr.bf16.mxu0 %v117
  %407 = vmatmul.mubr.bf16.gmra.mrb[0].mxu0 %v116
  %v408 = vpop.f32.mrb[0].mxu0
  %v409 = vadd.f32 %v361, %v408
  %v410 = vpop.f32.mrb[0].mxu0
  %v411 = vpop.f32.mrb[0].mxu0
  %v412 = vpop.f32.mrb[0].mxu0
  %413 = vdwg.mxu0
  %v414 = vmax.f32 %v401, 0.0
  %v415 = vmax.f32 %v404, 0.0
  %v416 = vmax.f32 %v409, 0.0
  %v417 = vpack.c.bf16 %v415, %v414
  %v418 = vpack.c.bf16 %v416, %v416
  %v421 = vunpack.c.l.b16 %v417
  %v422 = vunpack.c.h.b16 %v417
  %v423 = vunpack.c.l.b16 %v418
  %v424 = vpack.c.b16 %v421, %v421
  %v425 = vpack.c.b16 %v422, %v422
  %v426 = vpack.c.b16 %v423, %v423
  %430 = vst [vmem:[%s3] sm:$0xf] %v424
  %431 = vst [vmem:[%s3 + $0x4] sm:$0xf] %v425
  %432 = vst [vmem:[%s3 + $0x8] sm:$0xf] %v426
  // Predicated region
  $region14: #{_lambda_.4} parent=0 // pred_check
    _
  $region15: #{_lambda_.4} parent=0 // pred_check_branch
    %434 = sbr.rel (0) target = $region17
  $region16: #{_lambda_.4} parent=0 // pred_region
    _
  $region17: #{_lambda_.4} parent=0 // pred_fallthru
    _
  // Predicated region
  $region18: #{_lambda_.4} parent=0 // pred_check
    _
  $region19: #{_lambda_.4} parent=0 // pred_check_branch
    %436 = sbr.rel (0) target = $region21
  $region20: #{_lambda_.4} parent=0 // pred_region
    _
  $region21: #{_lambda_.4} parent=0 // pred_fallthru
    _

// kernel: _lambda_.5
$region0: #{_lambda_.5}
  #allocation0 [shape = 'u32[]', space=smem, size = 0x4, offset = 0x4, fixed_abs, tag = 'smem constant byte address 0x4 - core index']
  #allocation1 [shape = 'u32[144,128]{1,0:T(1,128)}', space=vmem, size = 0x12000, scoped, tag = 'internal scratch']
  %s0 = inlined_call_operand.vmem [shape: bf16[8,576], index: 0, kind: input, shape index: {}]
  %s1 = inlined_call_operand.vmem [shape: bf16[576,64], index: 1, kind: input, shape index: {}]
  %s2 = inlined_call_operand.vmem [shape: f32[1,64], index: 2, kind: input, shape index: {}]
  %s3 = inlined_call_operand.vmem [shape: bf16[64,512], index: 3, kind: input, shape index: {}]
  %s4 = inlined_call_operand.vmem [shape: f32[1,512], index: 4, kind: input, shape index: {}]
  %s5 = inlined_call_operand.vmem [shape: bf16[512,128], index: 5, kind: input, shape index: {}]
  %s6 = inlined_call_operand.vmem [shape: f32[1,128], index: 6, kind: input, shape index: {}]
  %s7 = inlined_call_operand.vmem [shape: f32[8,128], index: 7, kind: output, shape index: {}]
  %s8 = sld [smem:[#allocation0]]
  $region38: #{_lambda_.5} parent=0
    _
  %s10 = ssub.s32 1, %s8
  %s11 = scalar_select 0, %s10, %s8
  // Predicated region
  $region2: #{_lambda_.5} parent=0 // pred_check
    _
  $region3: #{_lambda_.5} parent=0 // pred_check_branch
    %13 = sbr.rel (0) target = $region5
  $region4: #{_lambda_.5} parent=0 // pred_region
    _
  $region5: #{_lambda_.5} parent=0 // pred_fallthru
    _
  // Predicated region
  $region6: #{_lambda_.5} parent=0 // pred_check
    _
  $region7: #{_lambda_.5} parent=0 // pred_check_branch
    %15 = sbr.rel (0) target = $region9
  $region8: #{_lambda_.5} parent=0 // pred_region
    _
  $region9: #{_lambda_.5} parent=0 // pred_fallthru
    _
  // Predicated region
  $region10: #{_lambda_.5} parent=0 // pred_check
    _
  $region11: #{_lambda_.5} parent=0 // pred_check_branch
    %17 = sbr.rel (0) target = $region13
  $region12: #{_lambda_.5} parent=0 // pred_region
    _
  $region13: #{_lambda_.5} parent=0 // pred_fallthru
    _
  // Predicated region
  $region14: #{_lambda_.5} parent=0 // pred_check
    _
  $region15: #{_lambda_.5} parent=0 // pred_check_branch
    %19 = sbr.rel (0) target = $region17
  $region16: #{_lambda_.5} parent=0 // pred_region
    _
  $region17: #{_lambda_.5} parent=0 // pred_fallthru
    _
  // Predicated region
  $region18: #{_lambda_.5} parent=0 // pred_check
    _
  $region19: #{_lambda_.5} parent=0 // pred_check_branch
    %21 = sbr.rel (0) target = $region21
  $region20: #{_lambda_.5} parent=0 // pred_region
    _
  $region21: #{_lambda_.5} parent=0 // pred_fallthru
    _
  // Predicated region
  $region22: #{_lambda_.5} parent=0 // pred_check
    _
  $region23: #{_lambda_.5} parent=0 // pred_check_branch
    %23 = sbr.rel (0) target = $region25
  $region24: #{_lambda_.5} parent=0 // pred_region
    _
  $region25: #{_lambda_.5} parent=0 // pred_fallthru
    _
  // Predicated region
  $region26: #{_lambda_.5} parent=0 // pred_check
    _
  $region27: #{_lambda_.5} parent=0 // pred_check_branch
    %25 = sbr.rel (0) target = $region29
  $region28: #{_lambda_.5} parent=0 // pred_region
    _
  $region29: #{_lambda_.5} parent=0 // pred_fallthru
    _
  %v27 = vld [vmem:[%s0] sm:$0xff]
  %v28 = vld [vmem:[%s0 + $0x8] sm:$0xff]
  %v29 = vld [vmem:[%s0 + $0x10] sm:$0xf]
  %v30 = vld [vmem:[%s1] sm:$0xf]
  %v31 = vld [vmem:[%s1 + $0x4] sm:$0xf]
  %v32 = vld [vmem:[%s1 + $0x8] sm:$0xf]
  %v33 = vld [vmem:[%s1 + $0xc] sm:$0xf]
  %v34 = vld [vmem:[%s1 + $0x10] sm:$0xf]
  %v35 = vld [vmem:[%s1 + $0x14] sm:$0xf]
  %v36 = vld [vmem:[%s1 + $0x18] sm:$0xf]
  %v37 = vld [vmem:[%s1 + $0x1c] sm:$0xf]
  %v38 = vld [vmem:[%s1 + $0x20] sm:$0xf]
  %v39 = vld [vmem:[%s1 + $0x24] sm:$0xf]
  %v40 = vld [vmem:[%s1 + $0x28] sm:$0xf]
  %v41 = vld [vmem:[%s1 + $0x2c] sm:$0xf]
  %v42 = vld [vmem:[%s1 + $0x30] sm:$0xf]
  %v43 = vld [vmem:[%s1 + $0x34] sm:$0xf]
  %v44 = vld [vmem:[%s1 + $0x38] sm:$0xf]
  %v45 = vld [vmem:[%s1 + $0x3c] sm:$0xf]
  %v46 = vld [vmem:[%s1 + $0x40] sm:$0xf]
  %v47 = vld [vmem:[%s1 + $0x44] sm:$0xf]
  %v48 = vld [vmem:[%s1 + $0x48] sm:$0xf]
  %v49 = vld [vmem:[%s1 + $0x4c] sm:$0xf]
  %v50 = vld [vmem:[%s1 + $0x50] sm:$0xf]
  %v51 = vld [vmem:[%s1 + $0x54] sm:$0xf]
  %v52 = vld [vmem:[%s1 + $0x58] sm:$0xf]
  %v53 = vld [vmem:[%s1 + $0x5c] sm:$0xf]
  %v54 = vld [vmem:[%s1 + $0x60] sm:$0xf]
  %v55 = vld [vmem:[%s1 + $0x64] sm:$0xf]
  %v56 = vld [vmem:[%s1 + $0x68] sm:$0xf]
  %v57 = vld [vmem:[%s1 + $0x6c] sm:$0xf]
  %v58 = vld [vmem:[%s1 + $0x70] sm:$0xf]
  %v59 = vld [vmem:[%s1 + $0x74] sm:$0xf]
  %v60 = vld [vmem:[%s1 + $0x78] sm:$0xf]
  %v61 = vld [vmem:[%s1 + $0x7c] sm:$0xf]
  %v62 = vld [vmem:[%s1 + $0x80] sm:$0xf]
  %v63 = vld [vmem:[%s1 + $0x84] sm:$0xf]
  %v64 = vld [vmem:[%s1 + $0x88] sm:$0xf]
  %v65 = vld [vmem:[%s1 + $0x8c] sm:$0xf]
  %v66 = vld [vmem:[%s1 + $0x90] sm:$0xf]
  %v67 = vld [vmem:[%s1 + $0x94] sm:$0xf]
  %v68 = vld [vmem:[%s1 + $0x98] sm:$0xf]
  %v69 = vld [vmem:[%s1 + $0x9c] sm:$0xf]
  %v70 = vld [vmem:[%s1 + $0xa0] sm:$0xf]
  %v71 = vld [vmem:[%s1 + $0xa4] sm:$0xf]
  %v72 = vld [vmem:[%s1 + $0xa8] sm:$0xf]
  %v73 = vld [vmem:[%s1 + $0xac] sm:$0xf]
  %v74 = vld [vmem:[%s1 + $0xb0] sm:$0xf]
  %v75 = vld [vmem:[%s1 + $0xb4] sm:$0xf]
  %v76 = vld [vmem:[%s1 + $0xb8] sm:$0xf]
  %v77 = vld [vmem:[%s1 + $0xbc] sm:$0xf]
  %v78 = vld [vmem:[%s1 + $0xc0] sm:$0xf]
  %v79 = vld [vmem:[%s1 + $0xc4] sm:$0xf]
  %v80 = vld [vmem:[%s1 + $0xc8] sm:$0xf]
  %v81 = vld [vmem:[%s1 + $0xcc] sm:$0xf]
  %v82 = vld [vmem:[%s1 + $0xd0] sm:$0xf]
  %v83 = vld [vmem:[%s1 + $0xd4] sm:$0xf]
  %v84 = vld [vmem:[%s1 + $0xd8] sm:$0xf]
  %v85 = vld [vmem:[%s1 + $0xdc] sm:$0xf]
  %v86 = vld [vmem:[%s1 + $0xe0] sm:$0xf]
  %v87 = vld [vmem:[%s1 + $0xe4] sm:$0xf]
  %v88 = vld [vmem:[%s1 + $0xe8] sm:$0xf]
  %v89 = vld [vmem:[%s1 + $0xec] sm:$0xf]
  %v90 = vld [vmem:[%s1 + $0xf0] sm:$0xf]
  %v91 = vld [vmem:[%s1 + $0xf4] sm:$0xf]
  %v92 = vld [vmem:[%s1 + $0xf8] sm:$0xf]
  %v93 = vld [vmem:[%s1 + $0xfc] sm:$0xf]
  %v94 = vld [vmem:[%s1 + $0x100] sm:$0xf]
  %v95 = vld [vmem:[%s1 + $0x104] sm:$0xf]
  %v96 = vld [vmem:[%s1 + $0x108] sm:$0xf]
  %v97 = vld [vmem:[%s1 + $0x10c] sm:$0xf]
  %v98 = vld [vmem:[%s1 + $0x110] sm:$0xf]
  %v99 = vld [vmem:[%s1 + $0x114] sm:$0xf]
  %v100 = vld [vmem:[%s1 + $0x118] sm:$0xf]
  %v101 = vld [vmem:[%s1 + $0x11c] sm:$0xf]
  %v102 = vld [vmem:[%s2] sm:$0x1]
  %v104 = vlaneseq
  %v105 = vshrl.u32 %v104, 7
  %v106 = vsub.s32 0, %v105
  %v107 = vrot.slane %v102, %v106
  %v112 = vunpack.c.l.b16 %v27
  %v113 = vunpack.c.h.b16 %v27
  %v114 = vunpack.c.l.b16 %v28
  %v115 = vunpack.c.h.b16 %v28
  %v116 = vunpack.c.l.b16 %v29
  %v117 = vpack.c.b16 %v112, %v112
  %v118 = vpack.c.b16 %v113, %v113
  %v119 = vpack.c.b16 %v114, %v114
  %v120 = vpack.c.b16 %v115, %v115
  %v121 = vpack.c.b16 %v116, %v116
  %v198 = vunpack.c.l.b16 %v30
  %v199 = vunpack.c.l.b16 %v31
  %v200 = vunpack.c.l.b16 %v32
  %v201 = vunpack.c.l.b16 %v33
  %v202 = vunpack.c.l.b16 %v34
  %v203 = vunpack.c.l.b16 %v35
  %v204 = vunpack.c.l.b16 %v36
  %v205 = vunpack.c.l.b16 %v37
  %v206 = vunpack.c.l.b16 %v38
  %v207 = vunpack.c.l.b16 %v39
  %v208 = vunpack.c.l.b16 %v40
  %v209 = vunpack.c.l.b16 %v41
  %v210 = vunpack.c.l.b16 %v42
  %v211 = vunpack.c.l.b16 %v43
  %v212 = vunpack.c.l.b16 %v44
  %v213 = vunpack.c.l.b16 %v45
  %v214 = vunpack.c.l.b16 %v46
  %v215 = vunpack.c.l.b16 %v47
  %v216 = vunpack.c.l.b16 %v48
  %v217 = vunpack.c.l.b16 %v49
  %v218 = vunpack.c.l.b16 %v50
  %v219 = vunpack.c.l.b16 %v51
  %v220 = vunpack.c.l.b16 %v52
  %v221 = vunpack.c.l.b16 %v53
  %v222 = vunpack.c.l.b16 %v54
  %v223 = vunpack.c.l.b16 %v55
  %v224 = vunpack.c.l.b16 %v56
  %v225 = vunpack.c.l.b16 %v57
  %v226 = vunpack.c.l.b16 %v58
  %v227 = vunpack.c.l.b16 %v59
  %v228 = vunpack.c.l.b16 %v60
  %v229 = vunpack.c.l.b16 %v61
  %v230 = vunpack.c.l.b16 %v62
  %v231 = vunpack.c.l.b16 %v63
  %v232 = vunpack.c.l.b16 %v64
  %v233 = vunpack.c.l.b16 %v65
  %v234 = vunpack.c.l.b16 %v66
  %v235 = vunpack.c.l.b16 %v67
  %v236 = vunpack.c.l.b16 %v68
  %v237 = vunpack.c.l.b16 %v69
  %v238 = vunpack.c.l.b16 %v70
  %v239 = vunpack.c.l.b16 %v71
  %v240 = vunpack.c.l.b16 %v72
  %v241 = vunpack.c.l.b16 %v73
  %v242 = vunpack.c.l.b16 %v74
  %v243 = vunpack.c.l.b16 %v75
  %v244 = vunpack.c.l.b16 %v76
  %v245 = vunpack.c.l.b16 %v77
  %v246 = vunpack.c.l.b16 %v78
  %v247 = vunpack.c.l.b16 %v79
  %v248 = vunpack.c.l.b16 %v80
  %v249 = vunpack.c.l.b16 %v81
  %v250 = vunpack.c.l.b16 %v82
  %v251 = vunpack.c.l.b16 %v83
  %v252 = vunpack.c.l.b16 %v84
  %v253 = vunpack.c.l.b16 %v85
  %v254 = vunpack.c.l.b16 %v86
  %v255 = vunpack.c.l.b16 %v87
  %v256 = vunpack.c.l.b16 %v88
  %v257 = vunpack.c.l.b16 %v89
  %v258 = vunpack.c.l.b16 %v90
  %v259 = vunpack.c.l.b16 %v91
  %v260 = vunpack.c.l.b16 %v92
  %v261 = vunpack.c.l.b16 %v93
  %v262 = vunpack.c.l.b16 %v94
  %v263 = vunpack.c.l.b16 %v95
  %v264 = vunpack.c.l.b16 %v96
  %v265 = vunpack.c.l.b16 %v97
  %v266 = vunpack.c.l.b16 %v98
  %v267 = vunpack.c.l.b16 %v99
  %v268 = vunpack.c.l.b16 %v100
  %v269 = vunpack.c.l.b16 %v101
  %v270 = vpack.c.b16 %v199, %v198
  %v271 = vpack.c.b16 %v201, %v200
  %v272 = vpack.c.b16 %v203, %v202
  %v273 = vpack.c.b16 %v205, %v204
  %v274 = vpack.c.b16 %v207, %v206
  %v275 = vpack.c.b16 %v209, %v208
  %v276 = vpack.c.b16 %v211, %v210
  %v277 = vpack.c.b16 %v213, %v212
  %v278 = vpack.c.b16 %v215, %v214
  %v279 = vpack.c.b16 %v217, %v216
  %v280 = vpack.c.b16 %v219, %v218
  %v281 = vpack.c.b16 %v221, %v220
  %v282 = vpack.c.b16 %v223, %v222
  %v283 = vpack.c.b16 %v225, %v224
  %v284 = vpack.c.b16 %v227, %v226
  %v285 = vpack.c.b16 %v229, %v228
  %v286 = vpack.c.b16 %v231, %v230
  %v287 = vpack.c.b16 %v233, %v232
  %v288 = vpack.c.b16 %v235, %v234
  %v289 = vpack.c.b16 %v237, %v236
  %v290 = vpack.c.b16 %v239, %v238
  %v291 = vpack.c.b16 %v241, %v240
  %v292 = vpack.c.b16 %v243, %v242
  %v293 = vpack.c.b16 %v245, %v244
  %v294 = vpack.c.b16 %v247, %v246
  %v295 = vpack.c.b16 %v249, %v248
  %v296 = vpack.c.b16 %v251, %v250
  %v297 = vpack.c.b16 %v253, %v252
  %v298 = vpack.c.b16 %v255, %v254
  %v299 = vpack.c.b16 %v257, %v256
  %v300 = vpack.c.b16 %v259, %v258
  %v301 = vpack.c.b16 %v261, %v260
  %v302 = vpack.c.b16 %v263, %v262
  %v303 = vpack.c.b16 %v265, %v264
  %v304 = vpack.c.b16 %v267, %v266
  %v305 = vpack.c.b16 %v269, %v268
  %vm342 = vcmask 523264
  %v344 = vsel %vm342, %v121, 0
  %346 = vmatprep.subr.bf16.mxu0 0
  %347 = vmatpush1.bf16.msra.mxu0 %v270
  %348 = vmatprep.subr.bf16.mxu0 0
  %349 = vmatpush1.bf16.msra.mxu0 %v271
  %350 = vmatprep.subr.bf16.mxu0 0
  %351 = vmatpush1.bf16.msra.mxu0 %v272
  %352 = vmatprep.subr.bf16.mxu0 0
  %353 = vmatpush1.bf16.msra.mxu0 %v273
  %354 = vmatprep.subr.bf16.mxu0 0
  %355 = vmatpush1.bf16.msra.mxu0 %v274
  %356 = vmatprep.subr.bf16.mxu0 0
  %357 = vmatpush1.bf16.msra.mxu0 %v275
  %358 = vmatprep.subr.bf16.mxu0 0
  %359 = vmatpush1.bf16.msra.mxu0 %v276
  %360 = vmatprep.subr.bf16.mxu0 0
  %361 = vmatpush1.bf16.msra.mxu0 %v277
  %362 = vmatprep.subr.bf16.mxu0 0
  %363 = vmatpush1.bf16.msra.mxu0 %v278
  %364 = vmatprep.subr.bf16.mxu0 0
  %365 = vmatpush1.bf16.msra.mxu0 %v279
  %366 = vmatprep.subr.bf16.mxu0 0
  %367 = vmatpush1.bf16.msra.mxu0 %v280
  %368 = vmatprep.subr.bf16.mxu0 0
  %369 = vmatpush1.bf16.msra.mxu0 %v281
  %370 = vmatprep.subr.bf16.mxu0 0
  %371 = vmatpush1.bf16.msra.mxu0 %v282
  %372 = vmatprep.subr.bf16.mxu0 0
  %373 = vmatpush1.bf16.msra.mxu0 %v283
  %374 = vmatprep.subr.bf16.mxu0 0
  %375 = vmatpush1.bf16.msra.mxu0 %v284
  %376 = vmatprep.subr.bf16.mxu0 0
  %377 = vmatpush1.bf16.msra.mxu0 %v285
  %378 = vmatprep.mubr.bf16.mxu0 %v118
  %379 = vmatmul.mubr.bf16.gmra.mrb[0].mxu0 %v117
  %v380 = vpop.f32.mrb[0].mxu0
  %v381 = vadd.f32 %v107, %v380
  %v382 = vpop.f32.mrb[0].mxu0
  %v383 = vpop.f32.mrb[0].mxu0
  %v384 = vpop.f32.mrb[0].mxu0
  %385 = vdwg.mxu0
  %386 = vmatprep.subr.bf16.mxu0 0
  %387 = vmatpush1.bf16.msra.mxu0 %v286
  %388 = vmatprep.subr.bf16.mxu0 0
  %389 = vmatpush1.bf16.msra.mxu0 %v287
  %390 = vmatprep.subr.bf16.mxu0 0
  %391 = vmatpush1.bf16.msra.mxu0 %v288
  %392 = vmatprep.subr.bf16.mxu0 0
  %393 = vmatpush1.bf16.msra.mxu0 %v289
  %394 = vmatprep.subr.bf16.mxu0 0
  %395 = vmatpush1.bf16.msra.mxu0 %v290
  %396 = vmatprep.subr.bf16.mxu0 0
  %397 = vmatpush1.bf16.msra.mxu0 %v291
  %398 = vmatprep.subr.bf16.mxu0 0
  %399 = vmatpush1.bf16.msra.mxu0 %v292
  %400 = vmatprep.subr.bf16.mxu0 0
  %401 = vmatpush1.bf16.msra.mxu0 %v293
  %402 = vmatprep.subr.bf16.mxu0 0
  %403 = vmatpush1.bf16.msra.mxu0 %v294
  %404 = vmatprep.subr.bf16.mxu0 0
  %405 = vmatpush1.bf16.msra.mxu0 %v295
  %406 = vmatprep.subr.bf16.mxu0 0
  %407 = vmatpush1.bf16.msra.mxu0 %v296
  %408 = vmatprep.subr.bf16.mxu0 0
  %409 = vmatpush1.bf16.msra.mxu0 %v297
  %410 = vmatprep.subr.bf16.mxu0 0
  %411 = vmatpush1.bf16.msra.mxu0 %v298
  %412 = vmatprep.subr.bf16.mxu0 0
  %413 = vmatpush1.bf16.msra.mxu0 %v299
  %414 = vmatprep.subr.bf16.mxu0 0
  %415 = vmatpush1.bf16.msra.mxu0 %v300
  %416 = vmatprep.subr.bf16.mxu0 0
  %417 = vmatpush1.bf16.msra.mxu0 %v301
  %418 = vmatprep.mubr.bf16.mxu0 %v120
  %419 = vmatmul.mubr.bf16.gmra.mrb[0].mxu0 %v119
  %v420 = vpop.f32.mrb[0].mxu0
  %v421 = vadd.f32 %v381, %v420
  %v422 = vpop.f32.mrb[0].mxu0
  %v423 = vpop.f32.mrb[0].mxu0
  %v424 = vpop.f32.mrb[0].mxu0
  %425 = vdwg.mxu0
  %426 = vmatprep.subr.bf16.mxu0 0
  %427 = vmatpush1.bf16.msra.mxu0 %v302
  %428 = vmatprep.subr.bf16.mxu0 0
  %429 = vmatpush1.bf16.msra.mxu0 %v303
  %430 = vmatprep.subr.bf16.mxu0 0
  %431 = vmatpush1.bf16.msra.mxu0 %v304
  %432 = vmatprep.subr.bf16.mxu0 0
  %433 = vmatpush1.bf16.msra.mxu0 %v305
  %434 = vmatprep.subr.bf16.mxu0 0
  %435 = vmatpush1.bf16.msra.mxu0 0
  %436 = vmatprep.subr.bf16.mxu0 0
  %437 = vmatpush1.bf16.msra.mxu0 0
  %438 = vmatprep.subr.bf16.mxu0 0
  %439 = vmatpush1.bf16.msra.mxu0 0
  %440 = vmatprep.subr.bf16.mxu0 0
  %441 = vmatpush1.bf16.msra.mxu0 0
  %442 = vmatprep.subr.bf16.mxu0 0
  %443 = vmatpush1.bf16.msra.mxu0 0
  %444 = vmatprep.subr.bf16.mxu0 0
  %445 = vmatpush1.bf16.msra.mxu0 0
  %446 = vmatprep.subr.bf16.mxu0 0
  %447 = vmatpush1.bf16.msra.mxu0 0
  %448 = vmatprep.subr.bf16.mxu0 0
  %449 = vmatpush1.bf16.msra.mxu0 0
  %450 = vmatprep.subr.bf16.mxu0 0
  %451 = vmatpush1.bf16.msra.mxu0 0
  %452 = vmatprep.subr.bf16.mxu0 0
  %453 = vmatpush1.bf16.msra.mxu0 0
  %454 = vmatprep.subr.bf16.mxu0 0
  %455 = vmatpush1.bf16.msra.mxu0 0
  %456 = vmatprep.subr.bf16.mxu0 0
  %457 = vmatpush1.bf16.msra.mxu0 0
  %458 = vmatprep.mubr.bf16.mxu0 0
  %459 = vmatmul.mubr.bf16.gmra.mrb[0].mxu0 %v344
  %v460 = vpop.f32.mrb[0].mxu0
  %v461 = vadd.f32 %v421, %v460
  %v462 = vpop.f32.mrb[0].mxu0
  %v463 = vpop.f32.mrb[0].mxu0
  %v464 = vpop.f32.mrb[0].mxu0
  %465 = vdwg.mxu0
  %v466 = vmax.f32 %v461, 0.0
  %v467 = vpack.c.bf16 %v466, %v466
  %v468 = vld [vmem:[%s3] sm:$0xff]
  %v469 = vld [vmem:[%s3 + $0x8] sm:$0xff]
  %v470 = vld [vmem:[%s3 + $0x10] sm:$0xff]
  %v471 = vld [vmem:[%s3 + $0x18] sm:$0xff]
  %v472 = vld [vmem:[%s3 + $0x20] sm:$0xff]
  %v473 = vld [vmem:[%s3 + $0x28] sm:$0xff]
  %v474 = vld [vmem:[%s3 + $0x30] sm:$0xff]
  %v475 = vld [vmem:[%s3 + $0x38] sm:$0xff]
  %v476 = vld [vmem:[%s3 + $0x40] sm:$0xff]
  %v477 = vld [vmem:[%s3 + $0x48] sm:$0xff]
  %v478 = vld [vmem:[%s3 + $0x50] sm:$0xff]
  %v479 = vld [vmem:[%s3 + $0x58] sm:$0xff]
  %v480 = vld [vmem:[%s3 + $0x60] sm:$0xff]
  %v481 = vld [vmem:[%s3 + $0x68] sm:$0xff]
  %v482 = vld [vmem:[%s3 + $0x70] sm:$0xff]
  %v483 = vld [vmem:[%s3 + $0x78] sm:$0xff]
  %v484 = vld [vmem:[%s4] sm:$0xf]
  %v486 = vlaneseq
  %v487 = vshrl.u32 %v486, 7
  %v488 = vsub.s32 0, %v487
  %v489 = vrot.slane %v484, %v488
  %v490 = vlaneseq
  %v491 = vshrl.u32 %v490, 7
  %v492 = vsub.s32 1, %v491
  %v493 = vrot.slane %v484, %v492
  %v494 = vlaneseq
  %v495 = vshrl.u32 %v494, 7
  %v496 = vsub.s32 2, %v495
  %v497 = vrot.slane %v484, %v496
  %v498 = vlaneseq
  %v499 = vshrl.u32 %v498, 7
  %v500 = vsub.s32 3, %v499
  %v501 = vrot.slane %v484, %v500
  %v522 = vunpack.c.l.b16 %v468
  %v523 = vunpack.c.h.b16 %v468
  %v524 = vunpack.c.l.b16 %v469
  %v525 = vunpack.c.h.b16 %v469
  %v526 = vunpack.c.l.b16 %v470
  %v527 = vunpack.c.h.b16 %v470
  %v528 = vunpack.c.l.b16 %v471
  %v529 = vunpack.c.h.b16 %v471
  %v530 = vunpack.c.l.b16 %v472
  %v531 = vunpack.c.h.b16 %v472
  %v532 = vunpack.c.l.b16 %v473
  %v533 = vunpack.c.h.b16 %v473
  %v534 = vunpack.c.l.b16 %v474
  %v535 = vunpack.c.h.b16 %v474
  %v536 = vunpack.c.l.b16 %v475
  %v537 = vunpack.c.h.b16 %v475
  %v538 = vunpack.c.l.b16 %v476
  %v539 = vunpack.c.h.b16 %v476
  %v540 = vunpack.c.l.b16 %v477
  %v541 = vunpack.c.h.b16 %v477
  %v542 = vunpack.c.l.b16 %v478
  %v543 = vunpack.c.h.b16 %v478
  %v544 = vunpack.c.l.b16 %v479
  %v545 = vunpack.c.h.b16 %v479
  %v546 = vunpack.c.l.b16 %v480
  %v547 = vunpack.c.h.b16 %v480
  %v548 = vunpack.c.l.b16 %v481
  %v549 = vunpack.c.h.b16 %v481
  %v550 = vunpack.c.l.b16 %v482
  %v551 = vunpack.c.h.b16 %v482
  %v552 = vunpack.c.l.b16 %v483
  %v553 = vunpack.c.h.b16 %v483
  %v554 = vpack.c.b16 %v526, %v522
  %v555 = vpack.c.b16 %v527, %v523
  %v556 = vpack.c.b16 %v528, %v524
  %v557 = vpack.c.b16 %v529, %v525
  %v558 = vpack.c.b16 %v534, %v530
  %v559 = vpack.c.b16 %v535, %v531
  %v560 = vpack.c.b16 %v536, %v532
  %v561 = vpack.c.b16 %v537, %v533
  %v562 = vpack.c.b16 %v542, %v538
  %v563 = vpack.c.b16 %v543, %v539
  %v564 = vpack.c.b16 %v544, %v540
  %v565 = vpack.c.b16 %v545, %v541
  %v566 = vpack.c.b16 %v550, %v546
  %v567 = vpack.c.b16 %v551, %v547
  %v568 = vpack.c.b16 %v552, %v548
  %v569 = vpack.c.b16 %v553, %v549
  %v587 = vsel %vm342, %v467, 0
  %589 = vmatprep.subr.bf16.mxu0 %v555
  %590 = vmatpush1.bf16.msra.mxu0 %v554
  %591 = vmatprep.subr.bf16.mxu0 %v559
  %592 = vmatpush1.bf16.msra.mxu0 %v558
  %593 = vmatprep.subr.bf16.mxu0 %v563
  %594 = vmatpush1.bf16.msra.mxu0 %v562
  %595 = vmatprep.subr.bf16.mxu0 %v567
  %596 = vmatpush1.bf16.msra.mxu0 %v566
  %597 = vmatprep.subr.bf16.mxu0 0
  %598 = vmatpush1.bf16.msra.mxu0 0
  %599 = vmatprep.subr.bf16.mxu0 0
  %600 = vmatpush1.bf16.msra.mxu0 0
  %601 = vmatprep.subr.bf16.mxu0 0
  %602 = vmatpush1.bf16.msra.mxu0 0
  %603 = vmatprep.subr.bf16.mxu0 0
  %604 = vmatpush1.bf16.msra.mxu0 0
  %605 = vmatprep.subr.bf16.mxu0 0
  %606 = vmatpush1.bf16.msra.mxu0 0
  %607 = vmatprep.subr.bf16.mxu0 0
  %608 = vmatpush1.bf16.msra.mxu0 0
  %609 = vmatprep.subr.bf16.mxu0 0
  %610 = vmatpush1.bf16.msra.mxu0 0
  %611 = vmatprep.subr.bf16.mxu0 0
  %612 = vmatpush1.bf16.msra.mxu0 0
  %613 = vmatprep.subr.bf16.mxu0 0
  %614 = vmatpush1.bf16.msra.mxu0 0
  %615 = vmatprep.subr.bf16.mxu0 0
  %616 = vmatpush1.bf16.msra.mxu0 0
  %617 = vmatprep.subr.bf16.mxu0 0
  %618 = vmatpush1.bf16.msra.mxu0 0
  %619 = vmatprep.subr.bf16.mxu0 0
  %620 = vmatpush1.bf16.msra.mxu0 0
  %621 = vmatprep.mubr.bf16.mxu0 0
  %622 = vmatmul.mubr.bf16.gmra.mrb[0].mxu0 %v587
  %v623 = vpop.f32.mrb[0].mxu0
  %v624 = vadd.f32 %v489, %v623
  %v625 = vpop.f32.mrb[0].mxu0
  %v626 = vadd.f32 %v493, %v625
  %v627 = vpop.f32.mrb[0].mxu0
  %v628 = vpop.f32.mrb[0].mxu0
  %629 = vdwg.mxu0
  %630 = vmatprep.subr.bf16.mxu0 %v557
  %631 = vmatpush1.bf16.msra.mxu0 %v556
  %632 = vmatprep.subr.bf16.mxu0 %v561
  %633 = vmatpush1.bf16.msra.mxu0 %v560
  %634 = vmatprep.subr.bf16.mxu0 %v565
  %635 = vmatpush1.bf16.msra.mxu0 %v564
  %636 = vmatprep.subr.bf16.mxu0 %v569
  %637 = vmatpush1.bf16.msra.mxu0 %v568
  %638 = vmatprep.subr.bf16.mxu0 0
  %639 = vmatpush1.bf16.msra.mxu0 0
  %640 = vmatprep.subr.bf16.mxu0 0
  %641 = vmatpush1.bf16.msra.mxu0 0
  %642 = vmatprep.subr.bf16.mxu0 0
  %643 = vmatpush1.bf16.msra.mxu0 0
  %644 = vmatprep.subr.bf16.mxu0 0
  %645 = vmatpush1.bf16.msra.mxu0 0
  %646 = vmatprep.subr.bf16.mxu0 0
  %647 = vmatpush1.bf16.msra.mxu0 0
  %648 = vmatprep.subr.bf16.mxu0 0
  %649 = vmatpush1.bf16.msra.mxu0 0
  %650 = vmatprep.subr.bf16.mxu0 0
  %651 = vmatpush1.bf16.msra.mxu0 0
  %652 = vmatprep.subr.bf16.mxu0 0
  %653 = vmatpush1.bf16.msra.mxu0 0
  %654 = vmatprep.subr.bf16.mxu0 0
  %655 = vmatpush1.bf16.msra.mxu0 0
  %656 = vmatprep.subr.bf16.mxu0 0
  %657 = vmatpush1.bf16.msra.mxu0 0
  %658 = vmatprep.subr.bf16.mxu0 0
  %659 = vmatpush1.bf16.msra.mxu0 0
  %660 = vmatprep.subr.bf16.mxu0 0
  %661 = vmatpush1.bf16.msra.mxu0 0
  %662 = vmatprep.mubr.bf16.mxu0 0
  %663 = vmatmul.mubr.bf16.gmra.mrb[0].mxu0 %v587
  %v664 = vpop.f32.mrb[0].mxu0
  %v665 = vadd.f32 %v497, %v664
  %v666 = vpop.f32.mrb[0].mxu0
  %v667 = vadd.f32 %v501, %v666
  %v668 = vpop.f32.mrb[0].mxu0
  %v669 = vpop.f32.mrb[0].mxu0
  %670 = vdwg.mxu0
  %v671 = vmax.f32 %v624, 0.0
  %v672 = vmax.f32 %v626, 0.0
  %v673 = vmax.f32 %v665, 0.0
  %v674 = vmax.f32 %v667, 0.0
  %v675 = vpack.c.bf16 %v671, %v671
  %v676 = vpack.c.bf16 %v672, %v672
  %v677 = vpack.c.bf16 %v673, %v673
  %v678 = vpack.c.bf16 %v674, %v674
  %v679 = vld [vmem:[%s5] sm:$0xf]
  %v680 = vld [vmem:[%s5 + $0x4] sm:$0xf]
  %v681 = vld [vmem:[%s5 + $0x8] sm:$0xf]
  %v682 = vld [vmem:[%s5 + $0xc] sm:$0xf]
  %v683 = vld [vmem:[%s5 + $0x10] sm:$0xf]
  %v684 = vld [vmem:[%s5 + $0x14] sm:$0xf]
  %v685 = vld [vmem:[%s5 + $0x18] sm:$0xf]
  %v686 = vld [vmem:[%s5 + $0x1c] sm:$0xf]
  %v687 = vld [vmem:[%s5 + $0x20] sm:$0xf]
  %v688 = vld [vmem:[%s5 + $0x24] sm:$0xf]
  %v689 = vld [vmem:[%s5 + $0x28] sm:$0xf]
  %v690 = vld [vmem:[%s5 + $0x2c] sm:$0xf]
  %v691 = vld [vmem:[%s5 + $0x30] sm:$0xf]
  %v692 = vld [vmem:[%s5 + $0x34] sm:$0xf]
  %v693 = vld [vmem:[%s5 + $0x38] sm:$0xf]
  %v694 = vld [vmem:[%s5 + $0x3c] sm:$0xf]
  %v695 = vld [vmem:[%s5 + $0x40] sm:$0xf]
  %v696 = vld [vmem:[%s5 + $0x44] sm:$0xf]
  %v697 = vld [vmem:[%s5 + $0x48] sm:$0xf]
  %v698 = vld [vmem:[%s5 + $0x4c] sm:$0xf]
  %v699 = vld [vmem:[%s5 + $0x50] sm:$0xf]
  %v700 = vld [vmem:[%s5 + $0x54] sm:$0xf]
  %v701 = vld [vmem:[%s5 + $0x58] sm:$0xf]
  %v702 = vld [vmem:[%s5 + $0x5c] sm:$0xf]
  %v703 = vld [vmem:[%s5 + $0x60] sm:$0xf]
  %v704 = vld [vmem:[%s5 + $0x64] sm:$0xf]
  %v705 = vld [vmem:[%s5 + $0x68] sm:$0xf]
  %v706 = vld [vmem:[%s5 + $0x6c] sm:$0xf]
  %v707 = vld [vmem:[%s5 + $0x70] sm:$0xf]
  %v708 = vld [vmem:[%s5 + $0x74] sm:$0xf]
  %v709 = vld [vmem:[%s5 + $0x78] sm:$0xf]
  %v710 = vld [vmem:[%s5 + $0x7c] sm:$0xf]
  %v711 = vld [vmem:[%s5 + $0x80] sm:$0xf]
  %v712 = vld [vmem:[%s5 + $0x84] sm:$0xf]
  %v713 = vld [vmem:[%s5 + $0x88] sm:$0xf]
  %v714 = vld [vmem:[%s5 + $0x8c] sm:$0xf]
  %v715 = vld [vmem:[%s5 + $0x90] sm:$0xf]
  %v716 = vld [vmem:[%s5 + $0x94] sm:$0xf]
  %v717 = vld [vmem:[%s5 + $0x98] sm:$0xf]
  %v718 = vld [vmem:[%s5 + $0x9c] sm:$0xf]
  %v719 = vld [vmem:[%s5 + $0xa0] sm:$0xf]
  %v720 = vld [vmem:[%s5 + $0xa4] sm:$0xf]
  %v721 = vld [vmem:[%s5 + $0xa8] sm:$0xf]
  %v722 = vld [vmem:[%s5 + $0xac] sm:$0xf]
  %v723 = vld [vmem:[%s5 + $0xb0] sm:$0xf]
  %v724 = vld [vmem:[%s5 + $0xb4] sm:$0xf]
  %v725 = vld [vmem:[%s5 + $0xb8] sm:$0xf]
  %v726 = vld [vmem:[%s5 + $0xbc] sm:$0xf]
  %v727 = vld [vmem:[%s5 + $0xc0] sm:$0xf]
  %v728 = vld [vmem:[%s5 + $0xc4] sm:$0xf]
  %v729 = vld [vmem:[%s5 + $0xc8] sm:$0xf]
  %v730 = vld [vmem:[%s5 + $0xcc] sm:$0xf]
  %v731 = vld [vmem:[%s5 + $0xd0] sm:$0xf]
  %v732 = vld [vmem:[%s5 + $0xd4] sm:$0xf]
  %v733 = vld [vmem:[%s5 + $0xd8] sm:$0xf]
  %v734 = vld [vmem:[%s5 + $0xdc] sm:$0xf]
  %v735 = vld [vmem:[%s5 + $0xe0] sm:$0xf]
  %v736 = vld [vmem:[%s5 + $0xe4] sm:$0xf]
  %v737 = vld [vmem:[%s5 + $0xe8] sm:$0xf]
  %v738 = vld [vmem:[%s5 + $0xec] sm:$0xf]
  %v739 = vld [vmem:[%s5 + $0xf0] sm:$0xf]
  %v740 = vld [vmem:[%s5 + $0xf4] sm:$0xf]
  %v741 = vld [vmem:[%s5 + $0xf8] sm:$0xf]
  %v742 = vld [vmem:[%s5 + $0xfc] sm:$0xf]
  %v743 = vld [vmem:[%s6] sm:$0x1]
  %v745 = vlaneseq
  %v746 = vshrl.u32 %v745, 7
  %v747 = vsub.s32 0, %v746
  %v748 = vrot.slane %v743, %v747
  %v814 = vunpack.c.l.b16 %v679
  %v815 = vunpack.c.l.b16 %v680
  %v816 = vunpack.c.l.b16 %v681
  %v817 = vunpack.c.l.b16 %v682
  %v818 = vunpack.c.l.b16 %v683
  %v819 = vunpack.c.l.b16 %v684
  %v820 = vunpack.c.l.b16 %v685
  %v821 = vunpack.c.l.b16 %v686
  %v822 = vunpack.c.l.b16 %v687
  %v823 = vunpack.c.l.b16 %v688
  %v824 = vunpack.c.l.b16 %v689
  %v825 = vunpack.c.l.b16 %v690
  %v826 = vunpack.c.l.b16 %v691
  %v827 = vunpack.c.l.b16 %v692
  %v828 = vunpack.c.l.b16 %v693
  %v829 = vunpack.c.l.b16 %v694
  %v830 = vunpack.c.l.b16 %v695
  %v831 = vunpack.c.l.b16 %v696
  %v832 = vunpack.c.l.b16 %v697
  %v833 = vunpack.c.l.b16 %v698
  %v834 = vunpack.c.l.b16 %v699
  %v835 = vunpack.c.l.b16 %v700
  %v836 = vunpack.c.l.b16 %v701
  %v837 = vunpack.c.l.b16 %v702
  %v838 = vunpack.c.l.b16 %v703
  %v839 = vunpack.c.l.b16 %v704
  %v840 = vunpack.c.l.b16 %v705
  %v841 = vunpack.c.l.b16 %v706
  %v842 = vunpack.c.l.b16 %v707
  %v843 = vunpack.c.l.b16 %v708
  %v844 = vunpack.c.l.b16 %v709
  %v845 = vunpack.c.l.b16 %v710
  %v846 = vunpack.c.l.b16 %v711
  %v847 = vunpack.c.l.b16 %v712
  %v848 = vunpack.c.l.b16 %v713
  %v849 = vunpack.c.l.b16 %v714
  %v850 = vunpack.c.l.b16 %v715
  %v851 = vunpack.c.l.b16 %v716
  %v852 = vunpack.c.l.b16 %v717
  %v853 = vunpack.c.l.b16 %v718
  %v854 = vunpack.c.l.b16 %v719
  %v855 = vunpack.c.l.b16 %v720
  %v856 = vunpack.c.l.b16 %v721
  %v857 = vunpack.c.l.b16 %v722
  %v858 = vunpack.c.l.b16 %v723
  %v859 = vunpack.c.l.b16 %v724
  %v860 = vunpack.c.l.b16 %v725
  %v861 = vunpack.c.l.b16 %v726
  %v862 = vunpack.c.l.b16 %v727
  %v863 = vunpack.c.l.b16 %v728
  %v864 = vunpack.c.l.b16 %v729
  %v865 = vunpack.c.l.b16 %v730
  %v866 = vunpack.c.l.b16 %v731
  %v867 = vunpack.c.l.b16 %v732
  %v868 = vunpack.c.l.b16 %v733
  %v869 = vunpack.c.l.b16 %v734
  %v870 = vunpack.c.l.b16 %v735
  %v871 = vunpack.c.l.b16 %v736
  %v872 = vunpack.c.l.b16 %v737
  %v873 = vunpack.c.l.b16 %v738
  %v874 = vunpack.c.l.b16 %v739
  %v875 = vunpack.c.l.b16 %v740
  %v876 = vunpack.c.l.b16 %v741
  %v877 = vunpack.c.l.b16 %v742
  %v878 = vpack.c.b16 %v815, %v814
  %v879 = vpack.c.b16 %v817, %v816
  %v880 = vpack.c.b16 %v819, %v818
  %v881 = vpack.c.b16 %v821, %v820
  %v882 = vpack.c.b16 %v823, %v822
  %v883 = vpack.c.b16 %v825, %v824
  %v884 = vpack.c.b16 %v827, %v826
  %v885 = vpack.c.b16 %v829, %v828
  %v886 = vpack.c.b16 %v831, %v830
  %v887 = vpack.c.b16 %v833, %v832
  %v888 = vpack.c.b16 %v835, %v834
  %v889 = vpack.c.b16 %v837, %v836
  %v890 = vpack.c.b16 %v839, %v838
  %v891 = vpack.c.b16 %v841, %v840
  %v892 = vpack.c.b16 %v843, %v842
  %v893 = vpack.c.b16 %v845, %v844
  %v894 = vpack.c.b16 %v847, %v846
  %v895 = vpack.c.b16 %v849, %v848
  %v896 = vpack.c.b16 %v851, %v850
  %v897 = vpack.c.b16 %v853, %v852
  %v898 = vpack.c.b16 %v855, %v854
  %v899 = vpack.c.b16 %v857, %v856
  %v900 = vpack.c.b16 %v859, %v858
  %v901 = vpack.c.b16 %v861, %v860
  %v902 = vpack.c.b16 %v863, %v862
  %v903 = vpack.c.b16 %v865, %v864
  %v904 = vpack.c.b16 %v867, %v866
  %v905 = vpack.c.b16 %v869, %v868
  %v906 = vpack.c.b16 %v871, %v870
  %v907 = vpack.c.b16 %v873, %v872
  %v908 = vpack.c.b16 %v875, %v874
  %v909 = vpack.c.b16 %v877, %v876
  %942 = vmatprep.subr.bf16.mxu0 0
  %943 = vmatpush1.bf16.msra.mxu0 %v878
  %944 = vmatprep.subr.bf16.mxu0 0
  %945 = vmatpush1.bf16.msra.mxu0 %v879
  %946 = vmatprep.subr.bf16.mxu0 0
  %947 = vmatpush1.bf16.msra.mxu0 %v880
  %948 = vmatprep.subr.bf16.mxu0 0
  %949 = vmatpush1.bf16.msra.mxu0 %v881
  %950 = vmatprep.subr.bf16.mxu0 0
  %951 = vmatpush1.bf16.msra.mxu0 %v882
  %952 = vmatprep.subr.bf16.mxu0 0
  %953 = vmatpush1.bf16.msra.mxu0 %v883
  %954 = vmatprep.subr.bf16.mxu0 0
  %955 = vmatpush1.bf16.msra.mxu0 %v884
  %956 = vmatprep.subr.bf16.mxu0 0
  %957 = vmatpush1.bf16.msra.mxu0 %v885
  %958 = vmatprep.subr.bf16.mxu0 0
  %959 = vmatpush1.bf16.msra.mxu0 %v886
  %960 = vmatprep.subr.bf16.mxu0 0
  %961 = vmatpush1.bf16.msra.mxu0 %v887
  %962 = vmatprep.subr.bf16.mxu0 0
  %963 = vmatpush1.bf16.msra.mxu0 %v888
  %964 = vmatprep.subr.bf16.mxu0 0
  %965 = vmatpush1.bf16.msra.mxu0 %v889
  %966 = vmatprep.subr.bf16.mxu0 0
  %967 = vmatpush1.bf16.msra.mxu0 %v890
  %968 = vmatprep.subr.bf16.mxu0 0
  %969 = vmatpush1.bf16.msra.mxu0 %v891
  %970 = vmatprep.subr.bf16.mxu0 0
  %971 = vmatpush1.bf16.msra.mxu0 %v892
  %972 = vmatprep.subr.bf16.mxu0 0
  %973 = vmatpush1.bf16.msra.mxu0 %v893
  %974 = vmatprep.mubr.bf16.mxu0 %v676
  %975 = vmatmul.mubr.bf16.gmra.mrb[0].mxu0 %v675
  %v976 = vpop.f32.mrb[0].mxu0
  %v977 = vadd.f32 %v748, %v976
  %v978 = vpop.f32.mrb[0].mxu0
  %v979 = vpop.f32.mrb[0].mxu0
  %v980 = vpop.f32.mrb[0].mxu0
  %981 = vdwg.mxu0
  %982 = vmatprep.subr.bf16.mxu0 0
  %983 = vmatpush1.bf16.msra.mxu0 %v894
  %984 = vmatprep.subr.bf16.mxu0 0
  %985 = vmatpush1.bf16.msra.mxu0 %v895
  %986 = vmatprep.subr.bf16.mxu0 0
  %987 = vmatpush1.bf16.msra.mxu0 %v896
  %988 = vmatprep.subr.bf16.mxu0 0
  %989 = vmatpush1.bf16.msra.mxu0 %v897
  %990 = vmatprep.subr.bf16.mxu0 0
  %991 = vmatpush1.bf16.msra.mxu0 %v898
  %992 = vmatprep.subr.bf16.mxu0 0
  %993 = vmatpush1.bf16.msra.mxu0 %v899
  %994 = vmatprep.subr.bf16.mxu0 0
  %995 = vmatpush1.bf16.msra.mxu0 %v900
  %996 = vmatprep.subr.bf16.mxu0 0
  %997 = vmatpush1.bf16.msra.mxu0 %v901
  %998 = vmatprep.subr.bf16.mxu0 0
  %999 = vmatpush1.bf16.msra.mxu0 %v902
  %1000 = vmatprep.subr.bf16.mxu0 0
  %1001 = vmatpush1.bf16.msra.mxu0 %v903
  %1002 = vmatprep.subr.bf16.mxu0 0
  %1003 = vmatpush1.bf16.msra.mxu0 %v904
  %1004 = vmatprep.subr.bf16.mxu0 0
  %1005 = vmatpush1.bf16.msra.mxu0 %v905
  %1006 = vmatprep.subr.bf16.mxu0 0
  %1007 = vmatpush1.bf16.msra.mxu0 %v906
  %1008 = vmatprep.subr.bf16.mxu0 0
  %1009 = vmatpush1.bf16.msra.mxu0 %v907
  %1010 = vmatprep.subr.bf16.mxu0 0
  %1011 = vmatpush1.bf16.msra.mxu0 %v908
  %1012 = vmatprep.subr.bf16.mxu0 0
  %1013 = vmatpush1.bf16.msra.mxu0 %v909
  %1014 = vmatprep.mubr.bf16.mxu0 %v678
  %1015 = vmatmul.mubr.bf16.gmra.mrb[0].mxu0 %v677
  %v1016 = vpop.f32.mrb[0].mxu0
  %v1017 = vadd.f32 %v977, %v1016
  %v1018 = vpop.f32.mrb[0].mxu0
  %v1019 = vpop.f32.mrb[0].mxu0
  %v1020 = vpop.f32.mrb[0].mxu0
  %1021 = vdwg.mxu0
  %1022 = vst [vmem:[%s7] sm:$0xff] %v1017
  // Predicated region
  $region30: #{_lambda_.5} parent=0 // pred_check
    _
  $region31: #{_lambda_.5} parent=0 // pred_check_branch
    %1024 = sbr.rel (0) target = $region33
  $region32: #{_lambda_.5} parent=0 // pred_region
    _
  $region33: #{_lambda_.5} parent=0 // pred_fallthru
    _
  // Predicated region
  $region34: #{_lambda_.5} parent=0 // pred_check
    _
  $region35: #{_lambda_.5} parent=0 // pred_check_branch
    %1026 = sbr.rel (0) target = $region37
  $region36: #{_lambda_.5} parent=0 // pred_region
    _
  $region37: #{_lambda_.5} parent=0 // pred_fallthru
    _

</llo_original>
